<compile_context>
chip_gen: v6e
topology: v6e:2x2x1
jax: 0.10.0
libtpu: 0.0.40
codegen_flags: <defaults>
</compile_context>

<pallas_src>
import functools

import jax
import jax.numpy as jnp
from jax.experimental import pallas as pl
from jax.experimental.pallas import tpu as pltpu

# ----------------------------- config (small, deterministic) ----------------
LATENT_DIM = 32      # latent_dim
NUM_EDGE_FEATS = 8   # num_edge_feats
MAX_LV = 3           # max_lv
NUM_NODES = 64       # N per graph
NUM_EDGES = 128      # E per graph
BATCH = 4            # graphs per pallas_call
D_PAD = 128          # lane-dense padded latent dim


def _embed_gnn_kernel(edge_ref, e2n_ref, n2n_ref, we2l_ref, w0_ref, *rest,
                      num_rounds, graphs_per_block, num_nodes, d_pad):
    """One block of G graphs per grid step. bf16 MXU operands, f32 accumulation."""
    w1_refs = rest[:num_rounds]
    w2_refs = rest[num_rounds:2 * num_rounds]
    out_ref = rest[2 * num_rounds]

    f32 = jnp.float32
    bf16 = jnp.bfloat16
    G, N, Dp = graphs_per_block, num_nodes, d_pad
    E = edge_ref.shape[1]
    F_ = edge_ref.shape[2]

    # input_edge_linear = relu(w_e2l(edge_feat)); all G graphs stacked on rows.
    edge_2d = edge_ref[...].reshape(G * E, F_)                       # [G*E, F] bf16
    edge_lin = jnp.maximum(
        jnp.dot(edge_2d, we2l_ref[...], preferred_element_type=f32), 0.0)
    edge_lin_g = edge_lin.astype(bf16).reshape(G, E, Dp)

    # e2n_pool = spmm(e2n_sp, input_edge_linear), batched over the G graphs.
    e2n_pool = jnp.einsum('gne,ged->gnd', e2n_ref[...], edge_lin_g,
                          preferred_element_type=f32)                # [G, N, Dp]
    e2n_pool_2d = e2n_pool.reshape(G * N, Dp)

    # static_message = conv_params_0(e2n_pool)
    static_message = jnp.dot(e2n_pool_2d.astype(bf16), w0_ref[...],
                             preferred_element_type=f32)             # [G*N, Dp]
    cur = jnp.maximum(static_message, 0.0)

    # max_lv - 1 message-passing rounds, statically unrolled.
    for r in range(num_rounds):
        cur_bf = cur.astype(bf16)
        # n2n_pool = spmm(n2n_sp, cur_message_layer), batched over G graphs.
        n2n_pool = jnp.einsum('gnm,gmd->gnd', n2n_ref[...],
                              cur_bf.reshape(G, N, Dp),
                              preferred_element_type=f32)            # [G, N, Dp]
        merged = (static_message
                  + jnp.dot(cur_bf, w1_refs[r][...],
                            preferred_element_type=f32)
                  + jnp.dot(n2n_pool.reshape(G * N, Dp).astype(bf16),
                            w2_refs[r][...], preferred_element_type=f32))
        cur = jnp.maximum(merged, 0.0)

    # Lane-dense (Dp=128) bf16 writeback; consumer slices to D.
    out_ref[...] = cur.reshape(G, N, Dp).astype(out_ref.dtype)


def embed_gnn_pallas(edge_feat, e2n_sp, n2n_sp, params, *, max_lv=MAX_LV,
                     d_pad=D_PAD, num_blocks=None):
    """edge_feat: [B,E,F], e2n_sp: [B,N,E], n2n_sp: [B,N,N]. Returns [B,N,D] f32.

    params: dict of pre-transposed ([in, out]) f32 weights (see init_params):
      we2l_t [F,D], w0_t [D,D], w1_t: list of [D,D], w2_t: list of [D,D].
    """
    B, E, F_ = edge_feat.shape
    _, N, _ = e2n_sp.shape
    D = params["w0_t"].shape[1]
    num_rounds = max(0, min(max_lv, 4) - 1)
    assert len(params["w1_t"]) >= num_rounds and len(params["w2_t"]) >= num_rounds
    bf16 = jnp.bfloat16

    if num_blocks is None:
        # 2 grid steps keep both v7x TensorCores busy; on single-TC v5e/v6e the
        # extra step is <1 us.  Use num_blocks=1 to fully collapse the grid.
        num_blocks = 2 if (B % 2 == 0 and B >= 2) else 1
    assert B % num_blocks == 0, "num_blocks must divide batch"
    G = B // num_blocks  # graphs per block

    # --- pad latent dim to 128 (lane-dense) and cast weights to bf16 ---------
    def pad_cast(w, rows, cols):
        return jnp.pad(w, ((0, rows - w.shape[0]),
                           (0, cols - w.shape[1]))).astype(bf16)

    we2l = pad_cast(params["we2l_t"], F_, d_pad)                     # [F, Dp]
    w0 = pad_cast(params["w0_t"], d_pad, d_pad)                      # [Dp, Dp]
    w1s = [pad_cast(params["w1_t"][r], d_pad, d_pad) for r in range(num_rounds)]
    w2s = [pad_cast(params["w2_t"][r], d_pad, d_pad) for r in range(num_rounds)]

    # --- cast graph operators to bf16 (0/1 adjacency is exact) --------------
    edge_bf = edge_feat.astype(bf16)
    e2n_bf = e2n_sp.astype(bf16)
    n2n_bf = n2n_sp.astype(bf16)

    # G graphs per block over the batch grid; weights pinned to block (0, 0)
    # so they stay VMEM-resident across all grid steps.
    def graph_spec(r, c):
        return pl.BlockSpec((G, r, c), lambda b: (b, 0, 0))

    def weight_spec(r, c):
        return pl.BlockSpec((r, c), lambda b: (0, 0))

    in_specs = ([graph_spec(E, F_), graph_spec(N, E), graph_spec(N, N),
                 weight_spec(F_, d_pad), weight_spec(d_pad, d_pad)]
                + [weight_spec(d_pad, d_pad) for _ in range(2 * num_rounds)])
    out_spec = pl.BlockSpec((G, N, d_pad), lambda b: (b, 0, 0))

    flops = 2 * B * (E * F_ * d_pad + N * E * d_pad + N * d_pad * d_pad
                     + num_rounds * (N * N * d_pad + 2 * N * d_pad * d_pad))
    bytes_accessed = (2 * (edge_bf.size + e2n_bf.size + n2n_bf.size)
                      + 2 * (we2l.size + w0.size
                             + sum(w.size for w in w1s + w2s))
                      + 2 * B * N * d_pad)

    kernel = functools.partial(_embed_gnn_kernel, num_rounds=num_rounds,
                               graphs_per_block=G, num_nodes=N, d_pad=d_pad)
    out_padded = pl.pallas_call(
        kernel,
        out_shape=jax.ShapeDtypeStruct((B, N, d_pad), bf16),
        grid=(num_blocks,),
        in_specs=in_specs,
        out_specs=out_spec,
        compiler_params=pltpu.CompilerParams(
            dimension_semantics=("parallel",)),
        cost_estimate=pl.CostEstimate(flops=flops, transcendentals=0,
                                      bytes_accessed=bytes_accessed),
    )(edge_bf, e2n_bf, n2n_bf, we2l, w0, *w1s, *w2s)

    # Downstream code that fuses can consume the padded bf16 buffer directly;
    # slice + widen here for the standalone check.
    return out_padded[:, :, :D].astype(jnp.float32)


def embed_gnn_reference(edge_feat, e2n_sp, n2n_sp, params, *, max_lv=MAX_LV):
    """Pure-JAX reference mimicking the kernel's bf16-operand / f32-accum math."""
    bf16 = jnp.bfloat16
    f32 = jnp.float32
    num_rounds = max(0, min(max_lv, 4) - 1)

    def dot(a, b):
        return jnp.dot(a.astype(bf16), b.astype(bf16),
                       preferred_element_type=f32)

    def single(ef, e2n, n2n):
        edge_lin = jnp.maximum(dot(ef, params["we2l_t"]), 0.0)
        e2n_pool = dot(e2n, edge_lin)
        static_message = dot(e2n_pool, params["w0_t"])
        cur = jnp.maximum(static_message, 0.0)
        for r in range(num_rounds):
            n2n_pool = dot(n2n, cur)
            merged = (static_message + dot(cur, params["w1_t"][r])
                      + dot(n2n_pool, params["w2_t"][r]))
            cur = jnp.maximum(merged, 0.0)
        return cur

    return jax.vmap(single)(edge_feat, e2n_sp, n2n_sp)


def init_params(key, latent_dim, num_edge_feats, max_lv):
    # Deterministic synthetic init (module's weights_init is just a re-init);
    # shapes mirror the nn.Linear(bias=False) layers, stored pre-transposed.
    num_rounds = max(0, min(max_lv, 4) - 1)
    ks = jax.random.split(key, 2 + 2 * num_rounds)
    scale = 0.1

    def w(k, n_in, n_out):
        return scale * jax.random.normal(k, (n_in, n_out), dtype=jnp.float32)

    return {
        "we2l_t": w(ks[0], num_edge_feats, latent_dim),                 # w_e2l
        "w0_t":   w(ks[1], latent_dim, latent_dim),                     # conv_params_0
        "w1_t":  [w(ks[2 + 2 * r], latent_dim, latent_dim)              # conv_params_1_*
                  for r in range(num_rounds)],
        "w2_t":  [w(ks[3 + 2 * r], latent_dim, latent_dim)              # conv_params_2_*
                  for r in range(num_rounds)],
    }


if __name__ == "__main__":
    key = jax.random.PRNGKey(0)
    k_edge, k_e2n, k_n2n, k_params = jax.random.split(key, 4)

    # Synthetic batched graph operators (PrepareMeanField outputs, densified):
    edge_feat = jax.random.uniform(
        k_edge, (BATCH, NUM_EDGES, NUM_EDGE_FEATS), dtype=jnp.float32)
    e2n_sp = (jax.random.uniform(k_e2n, (BATCH, NUM_NODES, NUM_EDGES)) > 0.9
              ).astype(jnp.float32)
    n2n_raw = (jax.random.uniform(k_n2n, (BATCH, NUM_NODES, NUM_NODES)) > 0.9
               ).astype(jnp.float32)
    n2n_sp = jnp.maximum(n2n_raw, jnp.swapaxes(n2n_raw, -1, -2))  # symmetric

    params = init_params(k_params, LATENT_DIM, NUM_EDGE_FEATS, MAX_LV)

    out = embed_gnn_pallas(edge_feat, e2n_sp, n2n_sp, params, max_lv=MAX_LV)
    out = jax.block_until_ready(out)

    ref = embed_gnn_reference(edge_feat, e2n_sp, n2n_sp, params, max_lv=MAX_LV)
    assert out.shape == (BATCH, NUM_NODES, LATENT_DIM)
    assert jnp.allclose(out, ref, atol=2e-2, rtol=2e-2), "mismatch vs reference"

    print("KERNEL_OK")
</pallas_src>

<mosaic_0001>
module attributes {stable_mosaic.version = 11 : i64} {
  func.func @_embed_gnn_kernel(%arg0: i32, %arg1: memref<2x128x8xbf16, #tpu.memory_space<vmem>>, %arg2: memref<2x64x128xbf16, #tpu.memory_space<vmem>>, %arg3: memref<2x64x64xbf16, #tpu.memory_space<vmem>>, %arg4: memref<8x128xbf16, #tpu.memory_space<vmem>>, %arg5: memref<128x128xbf16, #tpu.memory_space<vmem>>, %arg6: memref<128x128xbf16, #tpu.memory_space<vmem>>, %arg7: memref<128x128xbf16, #tpu.memory_space<vmem>>, %arg8: memref<128x128xbf16, #tpu.memory_space<vmem>>, %arg9: memref<128x128xbf16, #tpu.memory_space<vmem>>, %arg10: memref<2x64x128xbf16, #tpu.memory_space<vmem>>) attributes {dimension_semantics = [#tpu.dimension_semantics<parallel>], iteration_bounds = array<i64: 2>, scalar_prefetch = 0 : i64, scratch_operands = 0 : i64, tpu.core_type = #tpu.core_type<tc>, window_params = [{transform_indices = @transform_0, window_bounds = array<i64: 2, 128, 8>}, {transform_indices = @transform_1, window_bounds = array<i64: 2, 64, 128>}, {transform_indices = @transform_2, window_bounds = array<i64: 2, 64, 64>}, {pipeline_mode = #tpu.pipeline_mode<synchronous>, transform_indices = @transform_3, window_bounds = array<i64: 8, 128>}, {pipeline_mode = #tpu.pipeline_mode<synchronous>, transform_indices = @transform_4, window_bounds = array<i64: 128, 128>}, {pipeline_mode = #tpu.pipeline_mode<synchronous>, transform_indices = @transform_5, window_bounds = array<i64: 128, 128>}, {pipeline_mode = #tpu.pipeline_mode<synchronous>, transform_indices = @transform_6, window_bounds = array<i64: 128, 128>}, {pipeline_mode = #tpu.pipeline_mode<synchronous>, transform_indices = @transform_7, window_bounds = array<i64: 128, 128>}, {pipeline_mode = #tpu.pipeline_mode<synchronous>, transform_indices = @transform_8, window_bounds = array<i64: 128, 128>}, {transform_indices = @transform_9, window_bounds = array<i64: 2, 64, 128>}]} {
    %c0 = arith.constant 0 : index
    %c0_0 = arith.constant 0 : index
    %c0_1 = arith.constant 0 : index
    %0 = vector.load %arg1[%c0, %c0_0, %c0_1] : memref<2x128x8xbf16, #tpu.memory_space<vmem>>, vector<2x128x8xbf16>
    %1 = vector.shape_cast %0 : vector<2x128x8xbf16> to vector<256x8xbf16>
    %c0_2 = arith.constant 0 : index
    %c0_3 = arith.constant 0 : index
    %2 = vector.load %arg4[%c0_2, %c0_3] : memref<8x128xbf16, #tpu.memory_space<vmem>>, vector<8x128xbf16>
    %cst = arith.constant dense<0.000000e+00> : vector<256x128xf32>
    %3 = tpu.matmul %1, %2, %cst {dimension_numbers = #tpu.dot_dimension_numbers<[1], [0], [0], [1], [0, 0, 1, 1], [], []>} : vector<256x8xbf16>, vector<8x128xbf16>, vector<256x128xf32> -> vector<256x128xf32>
    %cst_4 = arith.constant 0.000000e+00 : f32
    %4 = vector.broadcast %cst_4 : f32 to vector<256x128xf32>
    %5 = arith.maximumf %3, %4 : vector<256x128xf32>
    %6 = arith.truncf %5 : vector<256x128xf32> to vector<256x128xbf16>
    %7 = vector.shape_cast %6 : vector<256x128xbf16> to vector<2x128x128xbf16>
    %c0_5 = arith.constant 0 : index
    %c0_6 = arith.constant 0 : index
    %c0_7 = arith.constant 0 : index
    %8 = vector.load %arg2[%c0_5, %c0_6, %c0_7] : memref<2x64x128xbf16, #tpu.memory_space<vmem>>, vector<2x64x128xbf16>
    "tpu.trace_start"() <{level = 10 : i32, message = "gne,ged->gnd"}> : () -> ()
    %cst_8 = arith.constant dense<0.000000e+00> : vector<2x64x128xf32>
    %9 = tpu.matmul %8, %7, %cst_8 {dimension_numbers = #tpu.dot_dimension_numbers<[2], [1], [1], [2], [0, 0, 0, 1, 1, 2], [0], [0]>} : vector<2x64x128xbf16>, vector<2x128x128xbf16>, vector<2x64x128xf32> -> vector<2x64x128xf32>
    "tpu.trace_stop"() : () -> ()
    %10 = vector.shape_cast %9 : vector<2x64x128xf32> to vector<128x128xf32>
    %11 = arith.truncf %10 : vector<128x128xf32> to vector<128x128xbf16>
    %c0_9 = arith.constant 0 : index
    %c0_10 = arith.constant 0 : index
    %12 = vector.load %arg5[%c0_9, %c0_10] : memref<128x128xbf16, #tpu.memory_space<vmem>>, vector<128x128xbf16>
    %cst_11 = arith.constant dense<0.000000e+00> : vector<128x128xf32>
    %13 = tpu.matmul %11, %12, %cst_11 {dimension_numbers = #tpu.dot_dimension_numbers<[1], [0], [0], [1], [0, 0, 1, 1], [], []>} : vector<128x128xbf16>, vector<128x128xbf16>, vector<128x128xf32> -> vector<128x128xf32>
    %cst_12 = arith.constant 0.000000e+00 : f32
    %14 = vector.broadcast %cst_12 : f32 to vector<128x128xf32>
    %15 = arith.maximumf %13, %14 : vector<128x128xf32>
    %16 = arith.truncf %15 : vector<128x128xf32> to vector<128x128xbf16>
    %c0_13 = arith.constant 0 : index
    %c0_14 = arith.constant 0 : index
    %c0_15 = arith.constant 0 : index
    %17 = vector.load %arg3[%c0_13, %c0_14, %c0_15] : memref<2x64x64xbf16, #tpu.memory_space<vmem>>, vector<2x64x64xbf16>
    %18 = vector.shape_cast %16 : vector<128x128xbf16> to vector<2x64x128xbf16>
    "tpu.trace_start"() <{level = 10 : i32, message = "gnm,gmd->gnd"}> : () -> ()
    %cst_16 = arith.constant dense<0.000000e+00> : vector<2x64x128xf32>
    %19 = tpu.matmul %17, %18, %cst_16 {dimension_numbers = #tpu.dot_dimension_numbers<[2], [1], [1], [2], [0, 0, 0, 1, 1, 2], [0], [0]>} : vector<2x64x64xbf16>, vector<2x64x128xbf16>, vector<2x64x128xf32> -> vector<2x64x128xf32>
    "tpu.trace_stop"() : () -> ()
    %c0_17 = arith.constant 0 : index
    %c0_18 = arith.constant 0 : index
    %20 = vector.load %arg6[%c0_17, %c0_18] : memref<128x128xbf16, #tpu.memory_space<vmem>>, vector<128x128xbf16>
    %cst_19 = arith.constant dense<0.000000e+00> : vector<128x128xf32>
    %21 = tpu.matmul %16, %20, %cst_19 {dimension_numbers = #tpu.dot_dimension_numbers<[1], [0], [0], [1], [0, 0, 1, 1], [], []>} : vector<128x128xbf16>, vector<128x128xbf16>, vector<128x128xf32> -> vector<128x128xf32>
    %22 = arith.addf %13, %21 : vector<128x128xf32>
    %23 = vector.shape_cast %19 : vector<2x64x128xf32> to vector<128x128xf32>
    %24 = arith.truncf %23 : vector<128x128xf32> to vector<128x128xbf16>
    %c0_20 = arith.constant 0 : index
    %c0_21 = arith.constant 0 : index
    %25 = vector.load %arg8[%c0_20, %c0_21] : memref<128x128xbf16, #tpu.memory_space<vmem>>, vector<128x128xbf16>
    %cst_22 = arith.constant dense<0.000000e+00> : vector<128x128xf32>
    %26 = tpu.matmul %24, %25, %cst_22 {dimension_numbers = #tpu.dot_dimension_numbers<[1], [0], [0], [1], [0, 0, 1, 1], [], []>} : vector<128x128xbf16>, vector<128x128xbf16>, vector<128x128xf32> -> vector<128x128xf32>
    %27 = arith.addf %22, %26 : vector<128x128xf32>
    %cst_23 = arith.constant 0.000000e+00 : f32
    %28 = vector.broadcast %cst_23 : f32 to vector<128x128xf32>
    %29 = arith.maximumf %27, %28 : vector<128x128xf32>
    %30 = arith.truncf %29 : vector<128x128xf32> to vector<128x128xbf16>
    %c0_24 = arith.constant 0 : index
    %c0_25 = arith.constant 0 : index
    %c0_26 = arith.constant 0 : index
    %31 = vector.load %arg3[%c0_24, %c0_25, %c0_26] : memref<2x64x64xbf16, #tpu.memory_space<vmem>>, vector<2x64x64xbf16>
    %32 = vector.shape_cast %30 : vector<128x128xbf16> to vector<2x64x128xbf16>
    "tpu.trace_start"() <{level = 10 : i32, message = "gnm,gmd->gnd"}> : () -> ()
    %cst_27 = arith.constant dense<0.000000e+00> : vector<2x64x128xf32>
    %33 = tpu.matmul %31, %32, %cst_27 {dimension_numbers = #tpu.dot_dimension_numbers<[2], [1], [1], [2], [0, 0, 0, 1, 1, 2], [0], [0]>} : vector<2x64x64xbf16>, vector<2x64x128xbf16>, vector<2x64x128xf32> -> vector<2x64x128xf32>
    "tpu.trace_stop"() : () -> ()
    %c0_28 = arith.constant 0 : index
    %c0_29 = arith.constant 0 : index
    %34 = vector.load %arg7[%c0_28, %c0_29] : memref<128x128xbf16, #tpu.memory_space<vmem>>, vector<128x128xbf16>
    %cst_30 = arith.constant dense<0.000000e+00> : vector<128x128xf32>
    %35 = tpu.matmul %30, %34, %cst_30 {dimension_numbers = #tpu.dot_dimension_numbers<[1], [0], [0], [1], [0, 0, 1, 1], [], []>} : vector<128x128xbf16>, vector<128x128xbf16>, vector<128x128xf32> -> vector<128x128xf32>
    %36 = arith.addf %13, %35 : vector<128x128xf32>
    %37 = vector.shape_cast %33 : vector<2x64x128xf32> to vector<128x128xf32>
    %38 = arith.truncf %37 : vector<128x128xf32> to vector<128x128xbf16>
    %c0_31 = arith.constant 0 : index
    %c0_32 = arith.constant 0 : index
    %39 = vector.load %arg9[%c0_31, %c0_32] : memref<128x128xbf16, #tpu.memory_space<vmem>>, vector<128x128xbf16>
    %cst_33 = arith.constant dense<0.000000e+00> : vector<128x128xf32>
    %40 = tpu.matmul %38, %39, %cst_33 {dimension_numbers = #tpu.dot_dimension_numbers<[1], [0], [0], [1], [0, 0, 1, 1], [], []>} : vector<128x128xbf16>, vector<128x128xbf16>, vector<128x128xf32> -> vector<128x128xf32>
    %41 = arith.addf %36, %40 : vector<128x128xf32>
    %cst_34 = arith.constant 0.000000e+00 : f32
    %42 = vector.broadcast %cst_34 : f32 to vector<128x128xf32>
    %43 = arith.maximumf %41, %42 : vector<128x128xf32>
    %44 = vector.shape_cast %43 : vector<128x128xf32> to vector<2x64x128xf32>
    %45 = arith.truncf %44 : vector<2x64x128xf32> to vector<2x64x128xbf16>
    %c0_35 = arith.constant 0 : index
    %c0_36 = arith.constant 0 : index
    %c0_37 = arith.constant 0 : index
    %46 = vector.load %arg10[%c0_35, %c0_36, %c0_37] : memref<2x64x128xbf16, #tpu.memory_space<vmem>>, vector<2x64x128xbf16>
    tpu.vector_store %arg10[%c0_35, %c0_36, %c0_37], %45 {strides = array<i32>} : memref<2x64x128xbf16, #tpu.memory_space<vmem>>, vector<2x64x128xbf16>,
    return
  }
  func.func @transform_0(%arg0: i32) -> (i32, i32, i32) {
    %c0_i32 = arith.constant 0 : i32
    %c0_i32_0 = arith.constant 0 : i32
    %c0_i32_1 = arith.constant 0 : i32
    return %arg0, %c0_i32, %c0_i32_0 : i32, i32, i32
  }
  func.func @transform_1(%arg0: i32) -> (i32, i32, i32) {
    %c0_i32 = arith.constant 0 : i32
    %c0_i32_0 = arith.constant 0 : i32
    %c0_i32_1 = arith.constant 0 : i32
    return %arg0, %c0_i32, %c0_i32_0 : i32, i32, i32
  }
  func.func @transform_2(%arg0: i32) -> (i32, i32, i32) {
    %c0_i32 = arith.constant 0 : i32
    %c0_i32_0 = arith.constant 0 : i32
    %c0_i32_1 = arith.constant 0 : i32
    return %arg0, %c0_i32, %c0_i32_0 : i32, i32, i32
  }
  func.func @transform_3(%arg0: i32) -> (i32, i32) {
    %c0_i32 = arith.constant 0 : i32
    %c0_i32_0 = arith.constant 0 : i32
    %c0_i32_1 = arith.constant 0 : i32
    return %c0_i32, %c0_i32_0 : i32, i32
  }
  func.func @transform_4(%arg0: i32) -> (i32, i32) {
    %c0_i32 = arith.constant 0 : i32
    %c0_i32_0 = arith.constant 0 : i32
    %c0_i32_1 = arith.constant 0 : i32
    return %c0_i32, %c0_i32_0 : i32, i32
  }
  func.func @transform_5(%arg0: i32) -> (i32, i32) {
    %c0_i32 = arith.constant 0 : i32
    %c0_i32_0 = arith.constant 0 : i32
    %c0_i32_1 = arith.constant 0 : i32
    return %c0_i32, %c0_i32_0 : i32, i32
  }
  func.func @transform_6(%arg0: i32) -> (i32, i32) {
    %c0_i32 = arith.constant 0 : i32
    %c0_i32_0 = arith.constant 0 : i32
    %c0_i32_1 = arith.constant 0 : i32
    return %c0_i32, %c0_i32_0 : i32, i32
  }
  func.func @transform_7(%arg0: i32) -> (i32, i32) {
    %c0_i32 = arith.constant 0 : i32
    %c0_i32_0 = arith.constant 0 : i32
    %c0_i32_1 = arith.constant 0 : i32
    return %c0_i32, %c0_i32_0 : i32, i32
  }
  func.func @transform_8(%arg0: i32) -> (i32, i32) {
    %c0_i32 = arith.constant 0 : i32
    %c0_i32_0 = arith.constant 0 : i32
    %c0_i32_1 = arith.constant 0 : i32
    return %c0_i32, %c0_i32_0 : i32, i32
  }
  func.func @transform_9(%arg0: i32) -> (i32, i32, i32) {
    %c0_i32 = arith.constant 0 : i32
    %c0_i32_0 = arith.constant 0 : i32
    %c0_i32_1 = arith.constant 0 : i32
    return %arg0, %c0_i32, %c0_i32_0 : i32, i32, i32
  }
}

</mosaic_0001>

<llo_original>
// kernel: tpu_custom_call.1
$region0: #{tpu_custom_call.1}
  #allocation0 [shape = 'u32[]', space=smem, size = 0x4, offset = 0x4, fixed_abs, tag = 'smem constant byte address 0x4 - core index']
  #allocation1 [shape = 'u32[144,128]{1,0:T(1,128)}', space=vmem, size = 0x12000, scoped, tag = 'internal scratch']
  %s0 = inlined_call_operand.vmem [shape: bf16[4,128,8], index: 0, kind: input, shape index: {}]
  %s1 = inlined_call_operand.vmem [shape: bf16[4,64,128], index: 1, kind: input, shape index: {}]
  %s2 = inlined_call_operand.vmem [shape: bf16[4,64,64], index: 2, kind: input, shape index: {}]
  %s3 = inlined_call_operand.vmem [shape: bf16[8,128], index: 3, kind: input, shape index: {}]
  %s4 = inlined_call_operand.hbm [shape: bf16[128,128], index: 4, kind: input, shape index: {}]
  %s5 = inlined_call_operand.hbm [shape: bf16[128,128], index: 5, kind: input, shape index: {}]
  %s6 = inlined_call_operand.hbm [shape: bf16[128,128], index: 6, kind: input, shape index: {}]
  %s7 = inlined_call_operand.hbm [shape: bf16[128,128], index: 7, kind: input, shape index: {}]
  %s8 = inlined_call_operand.hbm [shape: bf16[128,128], index: 8, kind: input, shape index: {}]
  %s9 = inlined_call_operand.hbm [shape: bf16[4,64,128], index: 9, kind: output, shape index: {}]
  %s10 = sld [smem:[#allocation0]]
  $region89: #{tpu_custom_call.1} parent=0
    _
  %s12 = ssub.s32 1, %s10
  %s13 = scalar_select 0, %s12, %s10
  $region1: #{tpu_custom_call.1} parent=0
    #allocation2 [shape = 'u8[32768]{0}', space=vmem, size = 0x8000, scoped, tag = 'input window, operand 4, single buffered']
    #allocation3 [shape = 's32[2]{0}', space=sflag, size = 0x8, scoped, tag = 'scoped memory for tpu_custom_call.1']
    #allocation4 [shape = 's32[2]{0}', space=sflag, size = 0x8, scoped, tag = 'scoped memory for tpu_custom_call.1']
    #allocation5 [shape = 'u8[32768]{0}', space=vmem, size = 0x8000, scoped, tag = 'input window, operand 5, single buffered']
    #allocation6 [shape = 's32[1]{0}', space=sflag, size = 0x4, scoped, tag = 'scoped memory for tpu_custom_call.1']
    #allocation7 [shape = 'u8[32768]{0}', space=vmem, size = 0x8000, scoped, tag = 'input window, operand 6, single buffered']
    #allocation8 [shape = 'u8[32768]{0}', space=vmem, size = 0x8000, scoped, tag = 'input window, operand 7, single buffered']
    #allocation9 [shape = 's32[1]{0}', space=sflag, size = 0x4, scoped, tag = 'scoped memory for tpu_custom_call.1']
    #allocation10 [shape = 'u8[32768]{0}', space=vmem, size = 0x8000, scoped, tag = 'input window, operand 8, single buffered']
    #allocation11 [shape = 'u8[65536]{0}', space=vmem, size = 0x10000, scoped, tag = 'output window, operand 0']
    %14 = vsyncpa [#allocation3], 0
    %15 = vsyncpa [#allocation6], 0
    %16 = vsyncpa [#allocation9], 0
    %17 = vsyncpa [#allocation4], 0
    %s18 = scalar_lea.sflag [#allocation4], 1
    %19 = vsyncpa %s18, 0
    loop: start=0, step=1, limit=4
    $region2: #{tpu_custom_call.1} parent=1 // loop_pre_header
      _
    $region3: #{tpu_custom_call.1} parent=1 // loop_header
      %s21 = sphi 0, %s25
      %p22 = scmp.ge.s32.totalorder %s21, 4
      %s31 = sphi 0, %s33
      %s34 = sphi 0, %s31
      %s35 = sphi 0, %s34
      %s51 = sphi 0, %s35
      %s57 = sphi 0, %s59
      %s60 = sphi 0, %s57
      %s61 = sphi 0, %s60
      %s77 = sphi 0, %s61
      %s83 = sphi 0, %s85
      %s86 = sphi 0, %s83
      %s87 = sphi 0, %s86
      %s103 = sphi 0, %s87
      %s107 = sphi 0, %s107
      %s109 = sphi 0, %s107
      %s110 = sphi 0, %s109
      %s124 = sphi 0, %s110
      %s128 = sphi 0, %s128
      %s130 = sphi 0, %s128
      %s131 = sphi 0, %s130
      %s145 = sphi 0, %s131
      %s149 = sphi 0, %s149
      %s151 = sphi 0, %s149
      %s152 = sphi 0, %s151
      %s166 = sphi 0, %s152
      %s170 = sphi 0, %s170
      %s172 = sphi 0, %s170
      %s173 = sphi 0, %s172
      %s187 = sphi 0, %s173
      %s191 = sphi 0, %s191
      %s193 = sphi 0, %s191
      %s194 = sphi 0, %s193
      %s208 = sphi 0, %s194
      %s212 = sphi 0, %s212
      %s214 = sphi 0, %s212
      %s215 = sphi 0, %s214
      %s229 = sphi 0, %s215
      %s235 = sphi 0, %s237
      %s238 = sphi 0, %s235
      %s239 = sphi 0, %s238
      %s255 = sphi 0, %s239
    $region4: #{tpu_custom_call.1} parent=1 // loop_header_branch
      %24 = sbr.rel (%p22) target = $region8
    $region5: #{tpu_custom_call.1} parent=1 // loop_body
      %s26 = ssub.s32 %s21, 1
      %s27 = ssub.s32 %s21, 2
      %s28 = sadd.s32 %s21, 1
      %s29 = ssub.s32 %s21, %s28
      %p30 = scmp.eq.s32.totalorder %s29, 0
      %s32 = sadd.s32 %s31, 1
      %s33 = scalar_select %p30, %s31, %s32
      %p36 = pneg %p30
      %p37 = scmp.eq.s32.totalorder %s21, 1
      %p38 = por %p36, %p37
      %p39 = scmp.ne.s32.totalorder %s31, %s34
      %p40 = scmp.eq.s32.totalorder %s21, 0
      %p41 = por %p39, %p40
      %p42 = scmp.ne.s32.totalorder %s31, %s34
      %p43 = scmp.eq.s32.totalorder %s26, 1
      %p44 = por %p42, %p43
      %p45 = scmp.ne.s32.totalorder %s34, %s35
      %p46 = scmp.eq.s32.totalorder %s26, 0
      %p47 = por %p45, %p46
      %p48 = scmp.ne.s32.totalorder %s34, %s35
      %p49 = scmp.eq.s32.totalorder %s27, 1
      %p50 = por %p48, %p49
      %p52 = scmp.ne.s32.totalorder %s35, %s51
      %p53 = scmp.eq.s32.totalorder %s27, 0
      %p54 = por %p52, %p53
      %s55 = ssub.s32 %s21, %s28
      %p56 = scmp.eq.s32.totalorder %s55, 0
      %s58 = sadd.s32 %s57, 1
      %s59 = scalar_select %p56, %s57, %s58
      %p62 = pneg %p56
      %p63 = scmp.eq.s32.totalorder %s21, 1
      %p64 = por %p62, %p63
      %p65 = scmp.ne.s32.totalorder %s57, %s60
      %p66 = scmp.eq.s32.totalorder %s21, 0
      %p67 = por %p65, %p66
      %p68 = scmp.ne.s32.totalorder %s57, %s60
      %p69 = scmp.eq.s32.totalorder %s26, 1
      %p70 = por %p68, %p69
      %p71 = scmp.ne.s32.totalorder %s60, %s61
      %p72 = scmp.eq.s32.totalorder %s26, 0
      %p73 = por %p71, %p72
      %p74 = scmp.ne.s32.totalorder %s60, %s61
      %p75 = scmp.eq.s32.totalorder %s27, 1
      %p76 = por %p74, %p75
      %p78 = scmp.ne.s32.totalorder %s61, %s77
      %p79 = scmp.eq.s32.totalorder %s27, 0
      %p80 = por %p78, %p79
      %s81 = ssub.s32 %s21, %s28
      %p82 = scmp.eq.s32.totalorder %s81, 0
      %s84 = sadd.s32 %s83, 1
      %s85 = scalar_select %p82, %s83, %s84
      %p88 = pneg %p82
      %p89 = scmp.eq.s32.totalorder %s21, 1
      %p90 = por %p88, %p89
      %p91 = scmp.ne.s32.totalorder %s83, %s86
      %p92 = scmp.eq.s32.totalorder %s21, 0
      %p93 = por %p91, %p92
      %p94 = scmp.ne.s32.totalorder %s83, %s86
      %p95 = scmp.eq.s32.totalorder %s26, 1
      %p96 = por %p94, %p95
      %p97 = scmp.ne.s32.totalorder %s86, %s87
      %p98 = scmp.eq.s32.totalorder %s26, 0
      %p99 = por %p97, %p98
      %p100 = scmp.ne.s32.totalorder %s86, %s87
      %p101 = scmp.eq.s32.totalorder %s27, 1
      %p102 = por %p100, %p101
      %p104 = scmp.ne.s32.totalorder %s87, %s103
      %p105 = scmp.eq.s32.totalorder %s27, 0
      %p106 = por %p104, %p105
      %s108 = sadd.s32 %s107, 1
      %p111 = scmp.eq.s32.totalorder %s21, 1
      %p112 = scmp.ne.s32.totalorder %s107, %s109
      %p113 = scmp.eq.s32.totalorder %s21, 0
      %p114 = por %p112, %p113
      %p115 = scmp.ne.s32.totalorder %s107, %s109
      %p116 = scmp.eq.s32.totalorder %s26, 1
      %p117 = por %p115, %p116
      %p118 = scmp.ne.s32.totalorder %s109, %s110
      %p119 = scmp.eq.s32.totalorder %s26, 0
      %p120 = por %p118, %p119
      %p121 = scmp.ne.s32.totalorder %s109, %s110
      %p122 = scmp.eq.s32.totalorder %s27, 1
      %p123 = por %p121, %p122
      %p125 = scmp.ne.s32.totalorder %s110, %s124
      %p126 = scmp.eq.s32.totalorder %s27, 0
      %p127 = por %p125, %p126
      %s129 = sadd.s32 %s128, 1
      %p132 = scmp.eq.s32.totalorder %s21, 1
      %p133 = scmp.ne.s32.totalorder %s128, %s130
      %p134 = scmp.eq.s32.totalorder %s21, 0
      %p135 = por %p133, %p134
      %p136 = scmp.ne.s32.totalorder %s128, %s130
      %p137 = scmp.eq.s32.totalorder %s26, 1
      %p138 = por %p136, %p137
      %p139 = scmp.ne.s32.totalorder %s130, %s131
      %p140 = scmp.eq.s32.totalorder %s26, 0
      %p141 = por %p139, %p140
      %p142 = scmp.ne.s32.totalorder %s130, %s131
      %p143 = scmp.eq.s32.totalorder %s27, 1
      %p144 = por %p142, %p143
      %p146 = scmp.ne.s32.totalorder %s131, %s145
      %p147 = scmp.eq.s32.totalorder %s27, 0
      %p148 = por %p146, %p147
      %s150 = sadd.s32 %s149, 1
      %p153 = scmp.eq.s32.totalorder %s21, 1
      %p154 = scmp.ne.s32.totalorder %s149, %s151
      %p155 = scmp.eq.s32.totalorder %s21, 0
      %p156 = por %p154, %p155
      %p157 = scmp.ne.s32.totalorder %s149, %s151
      %p158 = scmp.eq.s32.totalorder %s26, 1
      %p159 = por %p157, %p158
      %p160 = scmp.ne.s32.totalorder %s151, %s152
      %p161 = scmp.eq.s32.totalorder %s26, 0
      %p162 = por %p160, %p161
      %p163 = scmp.ne.s32.totalorder %s151, %s152
      %p164 = scmp.eq.s32.totalorder %s27, 1
      %p165 = por %p163, %p164
      %p167 = scmp.ne.s32.totalorder %s152, %s166
      %p168 = scmp.eq.s32.totalorder %s27, 0
      %p169 = por %p167, %p168
      %s171 = sadd.s32 %s170, 1
      %p174 = scmp.eq.s32.totalorder %s21, 1
      %p175 = scmp.ne.s32.totalorder %s170, %s172
      %p176 = scmp.eq.s32.totalorder %s21, 0
      %p177 = por %p175, %p176
      %p178 = scmp.ne.s32.totalorder %s170, %s172
      %p179 = scmp.eq.s32.totalorder %s26, 1
      %p180 = por %p178, %p179
      %p181 = scmp.ne.s32.totalorder %s172, %s173
      %p182 = scmp.eq.s32.totalorder %s26, 0
      %p183 = por %p181, %p182
      %p184 = scmp.ne.s32.totalorder %s172, %s173
      %p185 = scmp.eq.s32.totalorder %s27, 1
      %p186 = por %p184, %p185
      %p188 = scmp.ne.s32.totalorder %s173, %s187
      %p189 = scmp.eq.s32.totalorder %s27, 0
      %p190 = por %p188, %p189
      %s192 = sadd.s32 %s191, 1
      %p195 = scmp.eq.s32.totalorder %s21, 1
      %p196 = scmp.ne.s32.totalorder %s191, %s193
      %p197 = scmp.eq.s32.totalorder %s21, 0
      %p198 = por %p196, %p197
      %p199 = scmp.ne.s32.totalorder %s191, %s193
      %p200 = scmp.eq.s32.totalorder %s26, 1
      %p201 = por %p199, %p200
      %p202 = scmp.ne.s32.totalorder %s193, %s194
      %p203 = scmp.eq.s32.totalorder %s26, 0
      %p204 = por %p202, %p203
      %p205 = scmp.ne.s32.totalorder %s193, %s194
      %p206 = scmp.eq.s32.totalorder %s27, 1
      %p207 = por %p205, %p206
      %p209 = scmp.ne.s32.totalorder %s194, %s208
      %p210 = scmp.eq.s32.totalorder %s27, 0
      %p211 = por %p209, %p210
      %s213 = sadd.s32 %s212, 1
      %p216 = scmp.eq.s32.totalorder %s21, 1
      %p217 = scmp.ne.s32.totalorder %s212, %s214
      %p218 = scmp.eq.s32.totalorder %s21, 0
      %p219 = por %p217, %p218
      %p220 = scmp.ne.s32.totalorder %s212, %s214
      %p221 = scmp.eq.s32.totalorder %s26, 1
      %p222 = por %p220, %p221
      %p223 = scmp.ne.s32.totalorder %s214, %s215
      %p224 = scmp.eq.s32.totalorder %s26, 0
      %p225 = por %p223, %p224
      %p226 = scmp.ne.s32.totalorder %s214, %s215
      %p227 = scmp.eq.s32.totalorder %s27, 1
      %p228 = por %p226, %p227
      %p230 = scmp.ne.s32.totalorder %s215, %s229
      %p231 = scmp.eq.s32.totalorder %s27, 0
      %p232 = por %p230, %p231
      %s233 = ssub.s32 %s21, %s28
      %p234 = scmp.eq.s32.totalorder %s233, 0
      %s236 = sadd.s32 %s235, 1
      %s237 = scalar_select %p234, %s235, %s236
      %p240 = pneg %p234
      %p241 = scmp.eq.s32.totalorder %s21, 1
      %p242 = por %p240, %p241
      %p243 = scmp.ne.s32.totalorder %s235, %s238
      %p244 = scmp.eq.s32.totalorder %s21, 0
      %p245 = por %p243, %p244
      %p246 = scmp.ne.s32.totalorder %s235, %s238
      %p247 = scmp.eq.s32.totalorder %s26, 1
      %p248 = por %p246, %p247
      %p249 = scmp.ne.s32.totalorder %s238, %s239
      %p250 = scmp.eq.s32.totalorder %s26, 0
      %p251 = por %p249, %p250
      %p252 = scmp.ne.s32.totalorder %s238, %s239
      %p253 = scmp.eq.s32.totalorder %s27, 1
      %p254 = por %p252, %p253
      %p256 = scmp.ne.s32.totalorder %s239, %s255
      %p257 = scmp.eq.s32.totalorder %s27, 0
      %p258 = por %p256, %p257
      %p259 = scmp.le.s32.totalorder 1, %s21
      %p260 = scmp.lt.s32.totalorder %s21, 3
      %p261 = pnand %p259, %p260
      %p262 = pneg %p261
      // Predicated region
      $region9: #{tpu_custom_call.1} parent=5 // pred_check
        _
      $region10: #{tpu_custom_call.1} parent=5 // pred_check_branch
        %264 = sbr.rel (%p261) target = $region12
      $region11: #{tpu_custom_call.1} parent=5 // pred_region
        %s265 = ssub.s32 %s21, 1
        // Predicated region
        $region13: #{tpu_custom_call.1} parent=11 // pred_check
          %p266 = pneg %p120
        $region14: #{tpu_custom_call.1} parent=11 // pred_check_branch
          %268 = sbr.rel (%p266) target = $region16
        $region15: #{tpu_custom_call.1} parent=11 // pred_region
          _
        $region16: #{tpu_custom_call.1} parent=11 // pred_fallthru
          _
        // Predicated region
        $region17: #{tpu_custom_call.1} parent=11 // pred_check
          %p269 = pneg %p141
        $region18: #{tpu_custom_call.1} parent=11 // pred_check_branch
          %271 = sbr.rel (%p269) target = $region20
        $region19: #{tpu_custom_call.1} parent=11 // pred_region
          %s273 = ssub.s32 1024, 1024
          %274 = vsyncadd [#allocation3], %s273
          %s275 = sshll.u32 [#allocation2], 4
          %s276 = int_to_ptr.vmem [resolvable:$true] %s275
          %281 = dma.hbm_to_vmem [thread:$0]  %s4, 1024, %s276, [#allocation3], 64, 64, 4
        $region20: #{tpu_custom_call.1} parent=11 // pred_fallthru
          _
        // Predicated region
        $region21: #{tpu_custom_call.1} parent=11 // pred_check
          %p282 = pneg %p162
        $region22: #{tpu_custom_call.1} parent=11 // pred_check_branch
          %284 = sbr.rel (%p282) target = $region24
        $region23: #{tpu_custom_call.1} parent=11 // pred_region
          %s286 = ssub.s32 1024, 1024
          %287 = vsyncadd [#allocation6], %s286
          %s288 = sshll.u32 [#allocation5], 4
          %s289 = int_to_ptr.vmem [resolvable:$true] %s288
          %294 = dma.hbm_to_vmem [thread:$0]  %s5, 1024, %s289, [#allocation6], 64, 64, 4
        $region24: #{tpu_custom_call.1} parent=11 // pred_fallthru
          _
        // Predicated region
        $region25: #{tpu_custom_call.1} parent=11 // pred_check
          %p295 = pneg %p183
        $region26: #{tpu_custom_call.1} parent=11 // pred_check_branch
          %297 = sbr.rel (%p295) target = $region28
        $region27: #{tpu_custom_call.1} parent=11 // pred_region
          %s299 = ssub.s32 1024, 1024
          %300 = vsyncadd [#allocation6], %s299
          %s301 = sshll.u32 [#allocation7], 4
          %s302 = int_to_ptr.vmem [resolvable:$true] %s301
          %307 = dma.hbm_to_vmem [thread:$0]  %s6, 1024, %s302, [#allocation6], 64, 64, 4
        $region28: #{tpu_custom_call.1} parent=11 // pred_fallthru
          _
        // Predicated region
        $region29: #{tpu_custom_call.1} parent=11 // pred_check
          %p308 = pneg %p204
        $region30: #{tpu_custom_call.1} parent=11 // pred_check_branch
          %310 = sbr.rel (%p308) target = $region32
        $region31: #{tpu_custom_call.1} parent=11 // pred_region
          %s312 = ssub.s32 1024, 1024
          %313 = vsyncadd [#allocation9], %s312
          %s314 = sshll.u32 [#allocation8], 4
          %s315 = int_to_ptr.vmem [resolvable:$true] %s314
          %320 = dma.hbm_to_vmem [thread:$0]  %s7, 1024, %s315, [#allocation9], 64, 64, 4
        $region32: #{tpu_custom_call.1} parent=11 // pred_fallthru
          _
        // Predicated region
        $region33: #{tpu_custom_call.1} parent=11 // pred_check
          %p321 = pneg %p225
        $region34: #{tpu_custom_call.1} parent=11 // pred_check_branch
          %323 = sbr.rel (%p321) target = $region36
        $region35: #{tpu_custom_call.1} parent=11 // pred_region
          %s325 = ssub.s32 1024, 1024
          %326 = vsyncadd [#allocation9], %s325
          %s327 = sshll.u32 [#allocation10], 4
          %s328 = int_to_ptr.vmem [resolvable:$true] %s327
          %333 = dma.hbm_to_vmem [thread:$0]  %s8, 1024, %s328, [#allocation9], 64, 64, 4
        $region36: #{tpu_custom_call.1} parent=11 // pred_fallthru
          _
      $region12: #{tpu_custom_call.1} parent=5 // pred_fallthru
        _
      %p334 = scmp.lt.s32.totalorder %s21, 2
      // Predicated region
      $region37: #{tpu_custom_call.1} parent=5 // pred_check
        %p335 = pneg %p334
      $region38: #{tpu_custom_call.1} parent=5 // pred_check_branch
        %337 = sbr.rel (%p335) target = $region40
      $region39: #{tpu_custom_call.1} parent=5 // pred_region
        // Predicated region
        $region41: #{tpu_custom_call.1} parent=39 // pred_check
          %p338 = pneg %p41
        $region42: #{tpu_custom_call.1} parent=39 // pred_check_branch
          %340 = sbr.rel (%p338) target = $region44
        $region43: #{tpu_custom_call.1} parent=39 // pred_region
          %s341 = smul.u32 2, %s21
          %p342 = scmp.lt.s32.totalorder %s341, 3
          %s343 = scalar_select %p342, %s341, 3
          %s344 = smul.addr %s343, 16
          %s345 = smul.addr %s344, 4
          %s346 = scalar_lea.vmem %s0, %s345
          %s347 = smul.u32 2, %s21
        $region44: #{tpu_custom_call.1} parent=39 // pred_fallthru
          _
        // Predicated region
        $region45: #{tpu_custom_call.1} parent=39 // pred_check
          %p348 = pneg %p67
        $region46: #{tpu_custom_call.1} parent=39 // pred_check_branch
          %350 = sbr.rel (%p348) target = $region48
        $region47: #{tpu_custom_call.1} parent=39 // pred_region
          %s351 = smul.u32 2, %s21
          %p352 = scmp.lt.s32.totalorder %s351, 3
          %s353 = scalar_select %p352, %s351, 3
          %s354 = smul.addr %s353, 8
          %s355 = smul.addr %s354, 4
          %s356 = scalar_lea.vmem %s1, %s355
          %s357 = smul.u32 2, %s21
        $region48: #{tpu_custom_call.1} parent=39 // pred_fallthru
          _
        // Predicated region
        $region49: #{tpu_custom_call.1} parent=39 // pred_check
          %p358 = pneg %p93
        $region50: #{tpu_custom_call.1} parent=39 // pred_check_branch
          %360 = sbr.rel (%p358) target = $region52
        $region51: #{tpu_custom_call.1} parent=39 // pred_region
          %s361 = smul.u32 2, %s21
          %p362 = scmp.lt.s32.totalorder %s361, 3
          %s363 = scalar_select %p362, %s361, 3
          %s364 = smul.addr %s363, 8
          %s365 = smul.addr %s364, 4
          %s366 = scalar_lea.vmem %s2, %s365
          %s367 = smul.u32 2, %s21
        $region52: #{tpu_custom_call.1} parent=39 // pred_fallthru
          _
      $region40: #{tpu_custom_call.1} parent=5 // pred_fallthru
        _
      %p368 = scmp.le.s32.totalorder 1, %s21
      %p369 = scmp.lt.s32.totalorder %s21, 3
      %p370 = pnand %p368, %p369
      %p371 = pneg %p370
      // Predicated region
      $region53: #{tpu_custom_call.1} parent=5 // pred_check
        _
      $region54: #{tpu_custom_call.1} parent=5 // pred_check_branch
        %373 = sbr.rel (%p370) target = $region56
      $region55: #{tpu_custom_call.1} parent=5 // pred_region
        %s374 = ssub.s32 %s21, 1
        // Predicated region
        $region57: #{tpu_custom_call.1} parent=55 // pred_check
          %p375 = pneg %p141
        $region58: #{tpu_custom_call.1} parent=55 // pred_check_branch
          %377 = sbr.rel (%p375) target = $region60
        $region59: #{tpu_custom_call.1} parent=55 // pred_region
          %378 = dma.done [#allocation3], 1024
        $region60: #{tpu_custom_call.1} parent=55 // pred_fallthru
          _
        // Predicated region
        $region61: #{tpu_custom_call.1} parent=55 // pred_check
          %p379 = pneg %p162
        $region62: #{tpu_custom_call.1} parent=55 // pred_check_branch
          %381 = sbr.rel (%p379) target = $region64
        $region63: #{tpu_custom_call.1} parent=55 // pred_region
          %382 = dma.done [#allocation6], 1024
        $region64: #{tpu_custom_call.1} parent=55 // pred_fallthru
          _
        // Predicated region
        $region65: #{tpu_custom_call.1} parent=55 // pred_check
          %p383 = pneg %p183
        $region66: #{tpu_custom_call.1} parent=55 // pred_check_branch
          %385 = sbr.rel (%p383) target = $region68
        $region67: #{tpu_custom_call.1} parent=55 // pred_region
          %386 = dma.done [#allocation6], 1024
        $region68: #{tpu_custom_call.1} parent=55 // pred_fallthru
          _
        // Predicated region
        $region69: #{tpu_custom_call.1} parent=55 // pred_check
          %p387 = pneg %p204
        $region70: #{tpu_custom_call.1} parent=55 // pred_check_branch
          %389 = sbr.rel (%p387) target = $region72
        $region71: #{tpu_custom_call.1} parent=55 // pred_region
          %390 = dma.done [#allocation9], 1024
        $region72: #{tpu_custom_call.1} parent=55 // pred_fallthru
          _
        // Predicated region
        $region73: #{tpu_custom_call.1} parent=55 // pred_check
          %p391 = pneg %p225
        $region74: #{tpu_custom_call.1} parent=55 // pred_check_branch
          %393 = sbr.rel (%p391) target = $region76
        $region75: #{tpu_custom_call.1} parent=55 // pred_region
          %394 = dma.done [#allocation9], 1024
        $region76: #{tpu_custom_call.1} parent=55 // pred_fallthru
          _
        %s395 = smul.u32 2, %s26
        %p396 = scmp.lt.s32.totalorder %s395, 3
        %s397 = scalar_select %p396, %s395, 3
        %s398 = smul.addr %s397, 16
        %s399 = smul.addr %s398, 4
        %s400 = scalar_lea.vmem %s0, %s399
        %p401 = pneg %p47
        %p402 = pneg %p44
        %s403 = smul.u32 2, %s26
        %p404 = scmp.lt.s32.totalorder %s403, 3
        %s405 = scalar_select %p404, %s403, 3
        %s406 = smul.addr %s405, 8
        %s407 = smul.addr %s406, 4
        %s408 = scalar_lea.vmem %s1, %s407
        %p409 = pneg %p73
        %p410 = pneg %p70
        %s411 = smul.u32 2, %s26
        %p412 = scmp.lt.s32.totalorder %s411, 3
        %s413 = scalar_select %p412, %s411, 3
        %s414 = smul.addr %s413, 8
        %s415 = smul.addr %s414, 4
        %s416 = scalar_lea.vmem %s2, %s415
        %p417 = pneg %p99
        %p418 = pneg %p96
        %p419 = pneg %p120
        %p420 = pneg %p117
        %p421 = pneg %p141
        %p422 = pneg %p138
        %p423 = pneg %p162
        %p424 = pneg %p159
        %p425 = pneg %p183
        %p426 = pneg %p180
        %p427 = pneg %p204
        %p428 = pneg %p201
        %p429 = pneg %p225
        %p430 = pneg %p222
        %p431 = pneg %p251
        %p432 = pneg %p248
        %s433 = sand.u32 %s238, 1
        %s434 = scalar_lea.sflag [#allocation4], %s433
        %s435 = sand.u32 %s238, 1
        %s436 = smul.addr %s435, 64
        %s437 = scalar_lea.vmem [#allocation11], %s436
        %s438 = smul.u32 2, %s26
        %p439 = scmp.lt.s32.totalorder %s438, 3
        %s440 = scalar_select %p439, %s438, 3
        %s441 = smul.addr %s440, 16
        %s442 = smul.addr %s441, 4
        %s443 = scalar_lea.vmem %s0, %s442
        %s444 = smul.u32 2, %s26
        %s445 = smul.u32 2, %s26
        %p446 = scmp.lt.s32.totalorder %s445, 3
        %s447 = scalar_select %p446, %s445, 3
        %s448 = smul.addr %s447, 8
        %s449 = smul.addr %s448, 4
        %s450 = scalar_lea.vmem %s1, %s449
        %s451 = smul.u32 2, %s26
        %s452 = smul.u32 2, %s26
        %p453 = scmp.lt.s32.totalorder %s452, 3
        %s454 = scalar_select %p453, %s452, 3
        %s455 = smul.addr %s454, 8
        %s456 = smul.addr %s455, 4
        %s457 = scalar_lea.vmem %s2, %s456
        %s458 = smul.u32 2, %s26
        %s459 = smul.u32 2, %s26
        %v461 = vld [vmem:[%s443] sm:$0xf]
        %v462 = vld [vmem:[%s443 + $0x4] sm:$0xf]
        %v463 = vld [vmem:[%s443 + $0x8] sm:$0xf]
        %v464 = vld [vmem:[%s443 + $0xc] sm:$0xf]
        %v465 = vld [vmem:[%s443 + $0x10] sm:$0xf]
        %v466 = vld [vmem:[%s443 + $0x14] sm:$0xf]
        %v467 = vld [vmem:[%s443 + $0x18] sm:$0xf]
        %v468 = vld [vmem:[%s443 + $0x1c] sm:$0xf]
        %v469 = vld [vmem:[%s443 + $0x20] sm:$0xf]
        %v470 = vld [vmem:[%s443 + $0x24] sm:$0xf]
        %v471 = vld [vmem:[%s443 + $0x28] sm:$0xf]
        %v472 = vld [vmem:[%s443 + $0x2c] sm:$0xf]
        %v473 = vld [vmem:[%s443 + $0x30] sm:$0xf]
        %v474 = vld [vmem:[%s443 + $0x34] sm:$0xf]
        %v475 = vld [vmem:[%s443 + $0x38] sm:$0xf]
        %v476 = vld [vmem:[%s443 + $0x3c] sm:$0xf]
        %v477 = vld [vmem:[%s443 + $0x40] sm:$0xf]
        %v478 = vld [vmem:[%s443 + $0x44] sm:$0xf]
        %v479 = vld [vmem:[%s443 + $0x48] sm:$0xf]
        %v480 = vld [vmem:[%s443 + $0x4c] sm:$0xf]
        %v481 = vld [vmem:[%s443 + $0x50] sm:$0xf]
        %v482 = vld [vmem:[%s443 + $0x54] sm:$0xf]
        %v483 = vld [vmem:[%s443 + $0x58] sm:$0xf]
        %v484 = vld [vmem:[%s443 + $0x5c] sm:$0xf]
        %v485 = vld [vmem:[%s443 + $0x60] sm:$0xf]
        %v486 = vld [vmem:[%s443 + $0x64] sm:$0xf]
        %v487 = vld [vmem:[%s443 + $0x68] sm:$0xf]
        %v488 = vld [vmem:[%s443 + $0x6c] sm:$0xf]
        %v489 = vld [vmem:[%s443 + $0x70] sm:$0xf]
        %v490 = vld [vmem:[%s443 + $0x74] sm:$0xf]
        %v491 = vld [vmem:[%s443 + $0x78] sm:$0xf]
        %v492 = vld [vmem:[%s443 + $0x7c] sm:$0xf]
        %v493 = vld [vmem:[%s3] sm:$0xf]
        %v526 = vunpack.c.l.b16 %v461
        %v527 = vunpack.c.l.b16 %v462
        %v528 = vunpack.c.l.b16 %v463
        %v529 = vunpack.c.l.b16 %v464
        %v530 = vunpack.c.l.b16 %v465
        %v531 = vunpack.c.l.b16 %v466
        %v532 = vunpack.c.l.b16 %v467
        %v533 = vunpack.c.l.b16 %v468
        %v534 = vunpack.c.l.b16 %v469
        %v535 = vunpack.c.l.b16 %v470
        %v536 = vunpack.c.l.b16 %v471
        %v537 = vunpack.c.l.b16 %v472
        %v538 = vunpack.c.l.b16 %v473
        %v539 = vunpack.c.l.b16 %v474
        %v540 = vunpack.c.l.b16 %v475
        %v541 = vunpack.c.l.b16 %v476
        %v542 = vunpack.c.l.b16 %v477
        %v543 = vunpack.c.l.b16 %v478
        %v544 = vunpack.c.l.b16 %v479
        %v545 = vunpack.c.l.b16 %v480
        %v546 = vunpack.c.l.b16 %v481
        %v547 = vunpack.c.l.b16 %v482
        %v548 = vunpack.c.l.b16 %v483
        %v549 = vunpack.c.l.b16 %v484
        %v550 = vunpack.c.l.b16 %v485
        %v551 = vunpack.c.l.b16 %v486
        %v552 = vunpack.c.l.b16 %v487
        %v553 = vunpack.c.l.b16 %v488
        %v554 = vunpack.c.l.b16 %v489
        %v555 = vunpack.c.l.b16 %v490
        %v556 = vunpack.c.l.b16 %v491
        %v557 = vunpack.c.l.b16 %v492
        %v558 = vpack.c.b16 %v527, %v526
        %v559 = vpack.c.b16 %v529, %v528
        %v560 = vpack.c.b16 %v531, %v530
        %v561 = vpack.c.b16 %v533, %v532
        %v562 = vpack.c.b16 %v535, %v534
        %v563 = vpack.c.b16 %v537, %v536
        %v564 = vpack.c.b16 %v539, %v538
        %v565 = vpack.c.b16 %v541, %v540
        %v566 = vpack.c.b16 %v543, %v542
        %v567 = vpack.c.b16 %v545, %v544
        %v568 = vpack.c.b16 %v547, %v546
        %v569 = vpack.c.b16 %v549, %v548
        %v570 = vpack.c.b16 %v551, %v550
        %v571 = vpack.c.b16 %v553, %v552
        %v572 = vpack.c.b16 %v555, %v554
        %v573 = vpack.c.b16 %v557, %v556
        %vm574 = vcmask 64512
        %v576 = vsel %vm574, %v558, 0
        %v579 = vsel %vm574, %v559, 0
        %v582 = vsel %vm574, %v560, 0
        %v585 = vsel %vm574, %v561, 0
        %v588 = vsel %vm574, %v562, 0
        %v591 = vsel %vm574, %v563, 0
        %v594 = vsel %vm574, %v564, 0
        %v597 = vsel %vm574, %v565, 0
        %v600 = vsel %vm574, %v566, 0
        %v603 = vsel %vm574, %v567, 0
        %v606 = vsel %vm574, %v568, 0
        %v609 = vsel %vm574, %v569, 0
        %v612 = vsel %vm574, %v570, 0
        %v615 = vsel %vm574, %v571, 0
        %v618 = vsel %vm574, %v572, 0
        %v621 = vsel %vm574, %v573, 0
        %vm623 = vcmask 1043456
        %v625 = vsel %vm623, %v493, 0
        %627 = vmatprep.subr.bf16.mxu0 0
        %628 = vmatpush1.bf16.msra.mxu0 0
        %629 = vmatprep.subr.bf16.mxu0 0
        %630 = vmatpush1.bf16.msra.mxu0 0
        %631 = vmatprep.subr.bf16.mxu0 0
        %632 = vmatpush1.bf16.msra.mxu0 0
        %633 = vmatprep.subr.bf16.mxu0 0
        %634 = vmatpush1.bf16.msra.mxu0 0
        %635 = vmatprep.subr.bf16.mxu0 0
        %636 = vmatpush1.bf16.msra.mxu0 0
        %637 = vmatprep.subr.bf16.mxu0 0
        %638 = vmatpush1.bf16.msra.mxu0 0
        %639 = vmatprep.subr.bf16.mxu0 0
        %640 = vmatpush1.bf16.msra.mxu0 0
        %641 = vmatprep.subr.bf16.mxu0 0
        %642 = vmatpush1.bf16.msra.mxu0 %v625
        %643 = vmatprep.subr.bf16.mxu0 0
        %644 = vmatpush2.bf16.msra.mxu0 0
        %645 = vmatprep.subr.bf16.mxu0 0
        %646 = vmatpush2.bf16.msra.mxu0 0
        %647 = vmatprep.subr.bf16.mxu0 0
        %648 = vmatpush2.bf16.msra.mxu0 0
        %649 = vmatprep.subr.bf16.mxu0 0
        %650 = vmatpush2.bf16.msra.mxu0 0
        %651 = vmatprep.subr.bf16.mxu0 0
        %652 = vmatpush2.bf16.msra.mxu0 0
        %653 = vmatprep.subr.bf16.mxu0 0
        %654 = vmatpush2.bf16.msra.mxu0 0
        %655 = vmatprep.subr.bf16.mxu0 0
        %656 = vmatpush2.bf16.msra.mxu0 0
        %657 = vmatprep.subr.bf16.mxu0 0
        %658 = vmatpush2.bf16.msra.mxu0 0
        %659 = vmatprep.mubr.bf16.mxu0 0
        %660 = vmatmul.mubr.bf16.gmra.mxu0 %v576
        %v661 = vpop.f32.mrf.mxu0
        %v662 = vadd.f32 0.0, %v661
        %v663 = vpop.f32.mrf.mxu0
        %v664 = vpop.f32.mrf.mxu0
        %v665 = vadd.f32 0.0, %v664
        %v666 = vpop.f32.mrf.mxu0
        %667 = vmatprep.mubr.bf16.mxu0 0
        %668 = vmatmul.mubr.bf16.gmra.mxu0 %v579
        %v669 = vpop.f32.mrf.mxu0
        %v670 = vadd.f32 0.0, %v669
        %v671 = vpop.f32.mrf.mxu0
        %v672 = vpop.f32.mrf.mxu0
        %v673 = vadd.f32 0.0, %v672
        %v674 = vpop.f32.mrf.mxu0
        %675 = vmatprep.mubr.bf16.mxu0 0
        %676 = vmatmul.mubr.bf16.gmra.mxu0 %v582
        %v677 = vpop.f32.mrf.mxu0
        %v678 = vadd.f32 0.0, %v677
        %v679 = vpop.f32.mrf.mxu0
        %v680 = vpop.f32.mrf.mxu0
        %v681 = vadd.f32 0.0, %v680
        %v682 = vpop.f32.mrf.mxu0
        %683 = vmatprep.mubr.bf16.mxu0 0
        %684 = vmatmul.mubr.bf16.gmra.mxu0 %v585
        %v685 = vpop.f32.mrf.mxu0
        %v686 = vadd.f32 0.0, %v685
        %v687 = vpop.f32.mrf.mxu0
        %v688 = vpop.f32.mrf.mxu0
        %v689 = vadd.f32 0.0, %v688
        %v690 = vpop.f32.mrf.mxu0
        %691 = vmatprep.mubr.bf16.mxu0 0
        %692 = vmatmul.mubr.bf16.gmra.mxu0 %v588
        %v693 = vpop.f32.mrf.mxu0
        %v694 = vadd.f32 0.0, %v693
        %v695 = vpop.f32.mrf.mxu0
        %v696 = vpop.f32.mrf.mxu0
        %v697 = vadd.f32 0.0, %v696
        %v698 = vpop.f32.mrf.mxu0
        %699 = vmatprep.mubr.bf16.mxu0 0
        %700 = vmatmul.mubr.bf16.gmra.mxu0 %v591
        %v701 = vpop.f32.mrf.mxu0
        %v702 = vadd.f32 0.0, %v701
        %v703 = vpop.f32.mrf.mxu0
        %v704 = vpop.f32.mrf.mxu0
        %v705 = vadd.f32 0.0, %v704
        %v706 = vpop.f32.mrf.mxu0
        %707 = vmatprep.mubr.bf16.mxu0 0
        %708 = vmatmul.mubr.bf16.gmra.mxu0 %v594
        %v709 = vpop.f32.mrf.mxu0
        %v710 = vadd.f32 0.0, %v709
        %v711 = vpop.f32.mrf.mxu0
        %v712 = vpop.f32.mrf.mxu0
        %v713 = vadd.f32 0.0, %v712
        %v714 = vpop.f32.mrf.mxu0
        %715 = vmatprep.mubr.bf16.mxu0 0
        %716 = vmatmul.mubr.bf16.gmra.mxu0 %v597
        %v717 = vpop.f32.mrf.mxu0
        %v718 = vadd.f32 0.0, %v717
        %v719 = vpop.f32.mrf.mxu0
        %v720 = vpop.f32.mrf.mxu0
        %v721 = vadd.f32 0.0, %v720
        %v722 = vpop.f32.mrf.mxu0
        %723 = vmatprep.mubr.bf16.mxu0 0
        %724 = vmatmul.mubr.bf16.gmra.mxu0 %v600
        %v725 = vpop.f32.mrf.mxu0
        %v726 = vadd.f32 0.0, %v725
        %v727 = vpop.f32.mrf.mxu0
        %v728 = vpop.f32.mrf.mxu0
        %v729 = vadd.f32 0.0, %v728
        %v730 = vpop.f32.mrf.mxu0
        %731 = vmatprep.mubr.bf16.mxu0 0
        %732 = vmatmul.mubr.bf16.gmra.mxu0 %v603
        %v733 = vpop.f32.mrf.mxu0
        %v734 = vadd.f32 0.0, %v733
        %v735 = vpop.f32.mrf.mxu0
        %v736 = vpop.f32.mrf.mxu0
        %v737 = vadd.f32 0.0, %v736
        %v738 = vpop.f32.mrf.mxu0
        %739 = vmatprep.mubr.bf16.mxu0 0
        %740 = vmatmul.mubr.bf16.gmra.mxu0 %v606
        %v741 = vpop.f32.mrf.mxu0
        %v742 = vadd.f32 0.0, %v741
        %v743 = vpop.f32.mrf.mxu0
        %v744 = vpop.f32.mrf.mxu0
        %v745 = vadd.f32 0.0, %v744
        %v746 = vpop.f32.mrf.mxu0
        %747 = vmatprep.mubr.bf16.mxu0 0
        %748 = vmatmul.mubr.bf16.gmra.mxu0 %v609
        %v749 = vpop.f32.mrf.mxu0
        %v750 = vadd.f32 0.0, %v749
        %v751 = vpop.f32.mrf.mxu0
        %v752 = vpop.f32.mrf.mxu0
        %v753 = vadd.f32 0.0, %v752
        %v754 = vpop.f32.mrf.mxu0
        %755 = vmatprep.mubr.bf16.mxu0 0
        %756 = vmatmul.mubr.bf16.gmra.mxu0 %v612
        %v757 = vpop.f32.mrf.mxu0
        %v758 = vadd.f32 0.0, %v757
        %v759 = vpop.f32.mrf.mxu0
        %v760 = vpop.f32.mrf.mxu0
        %v761 = vadd.f32 0.0, %v760
        %v762 = vpop.f32.mrf.mxu0
        %763 = vmatprep.mubr.bf16.mxu0 0
        %764 = vmatmul.mubr.bf16.gmra.mxu0 %v615
        %v765 = vpop.f32.mrf.mxu0
        %v766 = vadd.f32 0.0, %v765
        %v767 = vpop.f32.mrf.mxu0
        %v768 = vpop.f32.mrf.mxu0
        %v769 = vadd.f32 0.0, %v768
        %v770 = vpop.f32.mrf.mxu0
        %771 = vmatprep.mubr.bf16.mxu0 0
        %772 = vmatmul.mubr.bf16.gmra.mxu0 %v618
        %v773 = vpop.f32.mrf.mxu0
        %v774 = vadd.f32 0.0, %v773
        %v775 = vpop.f32.mrf.mxu0
        %v776 = vpop.f32.mrf.mxu0
        %v777 = vadd.f32 0.0, %v776
        %v778 = vpop.f32.mrf.mxu0
        %779 = vmatprep.mubr.bf16.mxu0 0
        %780 = vmatmul.mubr.bf16.gmra.mxu0 %v621
        %v781 = vpop.f32.mrf.mxu0
        %v782 = vadd.f32 0.0, %v781
        %v783 = vpop.f32.mrf.mxu0
        %v784 = vpop.f32.mrf.mxu0
        %v785 = vadd.f32 0.0, %v784
        %v786 = vpop.f32.mrf.mxu0
        %787 = vdwg.mxu0
        %v788 = vmax.f32 %v662, 0.0
        %v789 = vmax.f32 %v665, 0.0
        %v790 = vmax.f32 %v670, 0.0
        %v791 = vmax.f32 %v673, 0.0
        %v792 = vmax.f32 %v678, 0.0
        %v793 = vmax.f32 %v681, 0.0
        %v794 = vmax.f32 %v686, 0.0
        %v795 = vmax.f32 %v689, 0.0
        %v796 = vmax.f32 %v694, 0.0
        %v797 = vmax.f32 %v697, 0.0
        %v798 = vmax.f32 %v702, 0.0
        %v799 = vmax.f32 %v705, 0.0
        %v800 = vmax.f32 %v710, 0.0
        %v801 = vmax.f32 %v713, 0.0
        %v802 = vmax.f32 %v718, 0.0
        %v803 = vmax.f32 %v721, 0.0
        %v804 = vmax.f32 %v726, 0.0
        %v805 = vmax.f32 %v729, 0.0
        %v806 = vmax.f32 %v734, 0.0
        %v807 = vmax.f32 %v737, 0.0
        %v808 = vmax.f32 %v742, 0.0
        %v809 = vmax.f32 %v745, 0.0
        %v810 = vmax.f32 %v750, 0.0
        %v811 = vmax.f32 %v753, 0.0
        %v812 = vmax.f32 %v758, 0.0
        %v813 = vmax.f32 %v761, 0.0
        %v814 = vmax.f32 %v766, 0.0
        %v815 = vmax.f32 %v769, 0.0
        %v816 = vmax.f32 %v774, 0.0
        %v817 = vmax.f32 %v777, 0.0
        %v818 = vmax.f32 %v782, 0.0
        %v819 = vmax.f32 %v785, 0.0
        %v820 = vpack.c.bf16 %v789, %v788
        %v821 = vpack.c.bf16 %v791, %v790
        %v822 = vpack.c.bf16 %v793, %v792
        %v823 = vpack.c.bf16 %v795, %v794
        %v824 = vpack.c.bf16 %v797, %v796
        %v825 = vpack.c.bf16 %v799, %v798
        %v826 = vpack.c.bf16 %v801, %v800
        %v827 = vpack.c.bf16 %v803, %v802
        %v828 = vpack.c.bf16 %v805, %v804
        %v829 = vpack.c.bf16 %v807, %v806
        %v830 = vpack.c.bf16 %v809, %v808
        %v831 = vpack.c.bf16 %v811, %v810
        %v832 = vpack.c.bf16 %v813, %v812
        %v833 = vpack.c.bf16 %v815, %v814
        %v834 = vpack.c.bf16 %v817, %v816
        %v835 = vpack.c.bf16 %v819, %v818
        %v836 = vld [vmem:[%s450] sm:$0xf]
        %v837 = vld [vmem:[%s450 + $0x4] sm:$0xf]
        %v838 = vld [vmem:[%s450 + $0x8] sm:$0xf]
        %v839 = vld [vmem:[%s450 + $0xc] sm:$0xf]
        %v840 = vld [vmem:[%s450 + $0x10] sm:$0xf]
        %v841 = vld [vmem:[%s450 + $0x14] sm:$0xf]
        %v842 = vld [vmem:[%s450 + $0x18] sm:$0xf]
        %v843 = vld [vmem:[%s450 + $0x1c] sm:$0xf]
        %v844 = vld [vmem:[%s450 + $0x20] sm:$0xf]
        %v845 = vld [vmem:[%s450 + $0x24] sm:$0xf]
        %v846 = vld [vmem:[%s450 + $0x28] sm:$0xf]
        %v847 = vld [vmem:[%s450 + $0x2c] sm:$0xf]
        %v848 = vld [vmem:[%s450 + $0x30] sm:$0xf]
        %v849 = vld [vmem:[%s450 + $0x34] sm:$0xf]
        %v850 = vld [vmem:[%s450 + $0x38] sm:$0xf]
        %v851 = vld [vmem:[%s450 + $0x3c] sm:$0xf]
        %v860 = vunpack.c.l.b16 %v836
        %v861 = vunpack.c.l.b16 %v837
        %v862 = vunpack.c.l.b16 %v838
        %v863 = vunpack.c.l.b16 %v839
        %v864 = vunpack.c.l.b16 %v840
        %v865 = vunpack.c.l.b16 %v841
        %v866 = vunpack.c.l.b16 %v842
        %v867 = vunpack.c.l.b16 %v843
        %v868 = vpack.c.b16 %v861, %v860
        %v869 = vpack.c.b16 %v863, %v862
        %v870 = vpack.c.b16 %v865, %v864
        %v871 = vpack.c.b16 %v867, %v866
        %876 = vmatprep.subr.bf16.mxu0 0
        %877 = vmatpush1.bf16.msra.mxu0 %v827
        %878 = vmatprep.subr.bf16.mxu0 0
        %879 = vmatpush1.bf16.msra.mxu0 %v826
        %880 = vmatprep.subr.bf16.mxu0 0
        %881 = vmatpush1.bf16.msra.mxu0 %v825
        %882 = vmatprep.subr.bf16.mxu0 0
        %883 = vmatpush1.bf16.msra.mxu0 %v824
        %884 = vmatprep.subr.bf16.mxu0 0
        %885 = vmatpush1.bf16.msra.mxu0 %v823
        %886 = vmatprep.subr.bf16.mxu0 0
        %887 = vmatpush1.bf16.msra.mxu0 %v822
        %888 = vmatprep.subr.bf16.mxu0 0
        %889 = vmatpush1.bf16.msra.mxu0 %v821
        %890 = vmatprep.subr.bf16.mxu0 0
        %891 = vmatpush1.bf16.msra.mxu0 %v820
        %892 = vmatprep.subr.bf16.mxu0 0
        %893 = vmatpush2.bf16.msra.mxu0 0
        %894 = vmatprep.subr.bf16.mxu0 0
        %895 = vmatpush2.bf16.msra.mxu0 0
        %896 = vmatprep.subr.bf16.mxu0 0
        %897 = vmatpush2.bf16.msra.mxu0 0
        %898 = vmatprep.subr.bf16.mxu0 0
        %899 = vmatpush2.bf16.msra.mxu0 0
        %900 = vmatprep.subr.bf16.mxu0 0
        %901 = vmatpush2.bf16.msra.mxu0 0
        %902 = vmatprep.subr.bf16.mxu0 0
        %903 = vmatpush2.bf16.msra.mxu0 0
        %904 = vmatprep.subr.bf16.mxu0 0
        %905 = vmatpush2.bf16.msra.mxu0 0
        %906 = vmatprep.subr.bf16.mxu0 0
        %907 = vmatpush2.bf16.msra.mxu0 0
        %908 = vmatprep.mubr.bf16.mxu0 0
        %909 = vmatmul.mubr.bf16.gmra.mxu0 %v868
        %v910 = vpop.f32.mrf.mxu0
        %v911 = vadd.f32 0.0, %v910
        %v912 = vpop.f32.mrf.mxu0
        %v913 = vpop.f32.mrf.mxu0
        %v914 = vadd.f32 0.0, %v913
        %v915 = vpop.f32.mrf.mxu0
        %916 = vmatprep.mubr.bf16.mxu0 0
        %917 = vmatmul.mubr.bf16.gmra.mxu0 %v869
        %v918 = vpop.f32.mrf.mxu0
        %v919 = vadd.f32 0.0, %v918
        %v920 = vpop.f32.mrf.mxu0
        %v921 = vpop.f32.mrf.mxu0
        %v922 = vadd.f32 0.0, %v921
        %v923 = vpop.f32.mrf.mxu0
        %924 = vmatprep.mubr.bf16.mxu0 0
        %925 = vmatmul.mubr.bf16.gmra.mxu0 %v870
        %v926 = vpop.f32.mrf.mxu0
        %v927 = vadd.f32 0.0, %v926
        %v928 = vpop.f32.mrf.mxu0
        %v929 = vpop.f32.mrf.mxu0
        %v930 = vadd.f32 0.0, %v929
        %v931 = vpop.f32.mrf.mxu0
        %932 = vmatprep.mubr.bf16.mxu0 0
        %933 = vmatmul.mubr.bf16.gmra.mxu0 %v871
        %v934 = vpop.f32.mrf.mxu0
        %v935 = vadd.f32 0.0, %v934
        %v936 = vpop.f32.mrf.mxu0
        %v937 = vpop.f32.mrf.mxu0
        %v938 = vadd.f32 0.0, %v937
        %v939 = vpop.f32.mrf.mxu0
        %940 = vdwg.mxu0
        %v949 = vunpack.c.l.b16 %v844
        %v950 = vunpack.c.l.b16 %v845
        %v951 = vunpack.c.l.b16 %v846
        %v952 = vunpack.c.l.b16 %v847
        %v953 = vunpack.c.l.b16 %v848
        %v954 = vunpack.c.l.b16 %v849
        %v955 = vunpack.c.l.b16 %v850
        %v956 = vunpack.c.l.b16 %v851
        %v957 = vpack.c.b16 %v950, %v949
        %v958 = vpack.c.b16 %v952, %v951
        %v959 = vpack.c.b16 %v954, %v953
        %v960 = vpack.c.b16 %v956, %v955
        %965 = vmatprep.subr.bf16.mxu0 0
        %966 = vmatpush1.bf16.msra.mxu0 %v835
        %967 = vmatprep.subr.bf16.mxu0 0
        %968 = vmatpush1.bf16.msra.mxu0 %v834
        %969 = vmatprep.subr.bf16.mxu0 0
        %970 = vmatpush1.bf16.msra.mxu0 %v833
        %971 = vmatprep.subr.bf16.mxu0 0
        %972 = vmatpush1.bf16.msra.mxu0 %v832
        %973 = vmatprep.subr.bf16.mxu0 0
        %974 = vmatpush1.bf16.msra.mxu0 %v831
        %975 = vmatprep.subr.bf16.mxu0 0
        %976 = vmatpush1.bf16.msra.mxu0 %v830
        %977 = vmatprep.subr.bf16.mxu0 0
        %978 = vmatpush1.bf16.msra.mxu0 %v829
        %979 = vmatprep.subr.bf16.mxu0 0
        %980 = vmatpush1.bf16.msra.mxu0 %v828
        %981 = vmatprep.subr.bf16.mxu0 0
        %982 = vmatpush2.bf16.msra.mxu0 0
        %983 = vmatprep.subr.bf16.mxu0 0
        %984 = vmatpush2.bf16.msra.mxu0 0
        %985 = vmatprep.subr.bf16.mxu0 0
        %986 = vmatpush2.bf16.msra.mxu0 0
        %987 = vmatprep.subr.bf16.mxu0 0
        %988 = vmatpush2.bf16.msra.mxu0 0
        %989 = vmatprep.subr.bf16.mxu0 0
        %990 = vmatpush2.bf16.msra.mxu0 0
        %991 = vmatprep.subr.bf16.mxu0 0
        %992 = vmatpush2.bf16.msra.mxu0 0
        %993 = vmatprep.subr.bf16.mxu0 0
        %994 = vmatpush2.bf16.msra.mxu0 0
        %995 = vmatprep.subr.bf16.mxu0 0
        %996 = vmatpush2.bf16.msra.mxu0 0
        %997 = vmatprep.mubr.bf16.mxu0 0
        %998 = vmatmul.mubr.bf16.gmra.mxu0 %v957
        %v999 = vpop.f32.mrf.mxu0
        %v1000 = vadd.f32 0.0, %v999
        %v1001 = vpop.f32.mrf.mxu0
        %v1002 = vpop.f32.mrf.mxu0
        %v1003 = vadd.f32 0.0, %v1002
        %v1004 = vpop.f32.mrf.mxu0
        %1005 = vmatprep.mubr.bf16.mxu0 0
        %1006 = vmatmul.mubr.bf16.gmra.mxu0 %v958
        %v1007 = vpop.f32.mrf.mxu0
        %v1008 = vadd.f32 0.0, %v1007
        %v1009 = vpop.f32.mrf.mxu0
        %v1010 = vpop.f32.mrf.mxu0
        %v1011 = vadd.f32 0.0, %v1010
        %v1012 = vpop.f32.mrf.mxu0
        %1013 = vmatprep.mubr.bf16.mxu0 0
        %1014 = vmatmul.mubr.bf16.gmra.mxu0 %v959
        %v1015 = vpop.f32.mrf.mxu0
        %v1016 = vadd.f32 0.0, %v1015
        %v1017 = vpop.f32.mrf.mxu0
        %v1018 = vpop.f32.mrf.mxu0
        %v1019 = vadd.f32 0.0, %v1018
        %v1020 = vpop.f32.mrf.mxu0
        %1021 = vmatprep.mubr.bf16.mxu0 0
        %1022 = vmatmul.mubr.bf16.gmra.mxu0 %v960
        %v1023 = vpop.f32.mrf.mxu0
        %v1024 = vadd.f32 0.0, %v1023
        %v1025 = vpop.f32.mrf.mxu0
        %v1026 = vpop.f32.mrf.mxu0
        %v1027 = vadd.f32 0.0, %v1026
        %v1028 = vpop.f32.mrf.mxu0
        %1029 = vdwg.mxu0
        %v1030 = vpack.c.bf16 %v914, %v911
        %v1031 = vpack.c.bf16 %v922, %v919
        %v1032 = vpack.c.bf16 %v930, %v927
        %v1033 = vpack.c.bf16 %v938, %v935
        %v1034 = vpack.c.bf16 %v1003, %v1000
        %v1035 = vpack.c.bf16 %v1011, %v1008
        %v1036 = vpack.c.bf16 %v1019, %v1016
        %v1037 = vpack.c.bf16 %v1027, %v1024
        %v1038 = vld [vmem:[#allocation2] sm:$0xf]
        %v1039 = vld [vmem:[#allocation2 + $0x4] sm:$0xf]
        %v1040 = vld [vmem:[#allocation2 + $0x8] sm:$0xf]
        %v1041 = vld [vmem:[#allocation2 + $0xc] sm:$0xf]
        %v1042 = vld [vmem:[#allocation2 + $0x10] sm:$0xf]
        %v1043 = vld [vmem:[#allocation2 + $0x14] sm:$0xf]
        %v1044 = vld [vmem:[#allocation2 + $0x18] sm:$0xf]
        %v1045 = vld [vmem:[#allocation2 + $0x1c] sm:$0xf]
        %v1046 = vld [vmem:[#allocation2 + $0x20] sm:$0xf]
        %v1047 = vld [vmem:[#allocation2 + $0x24] sm:$0xf]
        %v1048 = vld [vmem:[#allocation2 + $0x28] sm:$0xf]
        %v1049 = vld [vmem:[#allocation2 + $0x2c] sm:$0xf]
        %v1050 = vld [vmem:[#allocation2 + $0x30] sm:$0xf]
        %v1051 = vld [vmem:[#allocation2 + $0x34] sm:$0xf]
        %v1052 = vld [vmem:[#allocation2 + $0x38] sm:$0xf]
        %v1053 = vld [vmem:[#allocation2 + $0x3c] sm:$0xf]
        %v1070 = vunpack.c.l.b16 %v1038
        %v1071 = vunpack.c.l.b16 %v1039
        %v1072 = vunpack.c.l.b16 %v1040
        %v1073 = vunpack.c.l.b16 %v1041
        %v1074 = vunpack.c.l.b16 %v1042
        %v1075 = vunpack.c.l.b16 %v1043
        %v1076 = vunpack.c.l.b16 %v1044
        %v1077 = vunpack.c.l.b16 %v1045
        %v1078 = vunpack.c.l.b16 %v1046
        %v1079 = vunpack.c.l.b16 %v1047
        %v1080 = vunpack.c.l.b16 %v1048
        %v1081 = vunpack.c.l.b16 %v1049
        %v1082 = vunpack.c.l.b16 %v1050
        %v1083 = vunpack.c.l.b16 %v1051
        %v1084 = vunpack.c.l.b16 %v1052
        %v1085 = vunpack.c.l.b16 %v1053
        %v1086 = vpack.c.b16 %v1071, %v1070
        %v1087 = vpack.c.b16 %v1073, %v1072
        %v1088 = vpack.c.b16 %v1075, %v1074
        %v1089 = vpack.c.b16 %v1077, %v1076
        %v1090 = vpack.c.b16 %v1079, %v1078
        %v1091 = vpack.c.b16 %v1081, %v1080
        %v1092 = vpack.c.b16 %v1083, %v1082
        %v1093 = vpack.c.b16 %v1085, %v1084
        %1102 = vmatprep.subr.bf16.mxu0 0
        %1103 = vmatpush1.bf16.msra.mxu0 %v1093
        %1104 = vmatprep.subr.bf16.mxu0 0
        %1105 = vmatpush1.bf16.msra.mxu0 %v1092
        %1106 = vmatprep.subr.bf16.mxu0 0
        %1107 = vmatpush1.bf16.msra.mxu0 %v1091
        %1108 = vmatprep.subr.bf16.mxu0 0
        %1109 = vmatpush1.bf16.msra.mxu0 %v1090
        %1110 = vmatprep.subr.bf16.mxu0 0
        %1111 = vmatpush1.bf16.msra.mxu0 %v1089
        %1112 = vmatprep.subr.bf16.mxu0 0
        %1113 = vmatpush1.bf16.msra.mxu0 %v1088
        %1114 = vmatprep.subr.bf16.mxu0 0
        %1115 = vmatpush1.bf16.msra.mxu0 %v1087
        %1116 = vmatprep.subr.bf16.mxu0 0
        %1117 = vmatpush1.bf16.msra.mxu0 %v1086
        %1118 = vmatprep.subr.bf16.mxu0 0
        %1119 = vmatpush2.bf16.msra.mxu0 0
        %1120 = vmatprep.subr.bf16.mxu0 0
        %1121 = vmatpush2.bf16.msra.mxu0 0
        %1122 = vmatprep.subr.bf16.mxu0 0
        %1123 = vmatpush2.bf16.msra.mxu0 0
        %1124 = vmatprep.subr.bf16.mxu0 0
        %1125 = vmatpush2.bf16.msra.mxu0 0
        %1126 = vmatprep.subr.bf16.mxu0 0
        %1127 = vmatpush2.bf16.msra.mxu0 0
        %1128 = vmatprep.subr.bf16.mxu0 0
        %1129 = vmatpush2.bf16.msra.mxu0 0
        %1130 = vmatprep.subr.bf16.mxu0 0
        %1131 = vmatpush2.bf16.msra.mxu0 0
        %1132 = vmatprep.subr.bf16.mxu0 0
        %1133 = vmatpush2.bf16.msra.mxu0 0
        %1134 = vmatprep.mubr.bf16.mxu0 0
        %1135 = vmatmul.mubr.bf16.gmra.mxu0 %v1030
        %v1136 = vpop.f32.mrf.mxu0
        %v1137 = vadd.f32 0.0, %v1136
        %v1138 = vpop.f32.mrf.mxu0
        %v1139 = vpop.f32.mrf.mxu0
        %v1140 = vadd.f32 0.0, %v1139
        %v1141 = vpop.f32.mrf.mxu0
        %1142 = vmatprep.mubr.bf16.mxu0 0
        %1143 = vmatmul.mubr.bf16.gmra.mxu0 %v1031
        %v1144 = vpop.f32.mrf.mxu0
        %v1145 = vadd.f32 0.0, %v1144
        %v1146 = vpop.f32.mrf.mxu0
        %v1147 = vpop.f32.mrf.mxu0
        %v1148 = vadd.f32 0.0, %v1147
        %v1149 = vpop.f32.mrf.mxu0
        %1150 = vmatprep.mubr.bf16.mxu0 0
        %1151 = vmatmul.mubr.bf16.gmra.mxu0 %v1032
        %v1152 = vpop.f32.mrf.mxu0
        %v1153 = vadd.f32 0.0, %v1152
        %v1154 = vpop.f32.mrf.mxu0
        %v1155 = vpop.f32.mrf.mxu0
        %v1156 = vadd.f32 0.0, %v1155
        %v1157 = vpop.f32.mrf.mxu0
        %1158 = vmatprep.mubr.bf16.mxu0 0
        %1159 = vmatmul.mubr.bf16.gmra.mxu0 %v1033
        %v1160 = vpop.f32.mrf.mxu0
        %v1161 = vadd.f32 0.0, %v1160
        %v1162 = vpop.f32.mrf.mxu0
        %v1163 = vpop.f32.mrf.mxu0
        %v1164 = vadd.f32 0.0, %v1163
        %v1165 = vpop.f32.mrf.mxu0
        %1166 = vmatprep.mubr.bf16.mxu0 0
        %1167 = vmatmul.mubr.bf16.gmra.mxu0 %v1034
        %v1168 = vpop.f32.mrf.mxu0
        %v1169 = vadd.f32 0.0, %v1168
        %v1170 = vpop.f32.mrf.mxu0
        %v1171 = vpop.f32.mrf.mxu0
        %v1172 = vadd.f32 0.0, %v1171
        %v1173 = vpop.f32.mrf.mxu0
        %1174 = vmatprep.mubr.bf16.mxu0 0
        %1175 = vmatmul.mubr.bf16.gmra.mxu0 %v1035
        %v1176 = vpop.f32.mrf.mxu0
        %v1177 = vadd.f32 0.0, %v1176
        %v1178 = vpop.f32.mrf.mxu0
        %v1179 = vpop.f32.mrf.mxu0
        %v1180 = vadd.f32 0.0, %v1179
        %v1181 = vpop.f32.mrf.mxu0
        %1182 = vmatprep.mubr.bf16.mxu0 0
        %1183 = vmatmul.mubr.bf16.gmra.mxu0 %v1036
        %v1184 = vpop.f32.mrf.mxu0
        %v1185 = vadd.f32 0.0, %v1184
        %v1186 = vpop.f32.mrf.mxu0
        %v1187 = vpop.f32.mrf.mxu0
        %v1188 = vadd.f32 0.0, %v1187
        %v1189 = vpop.f32.mrf.mxu0
        %1190 = vmatprep.mubr.bf16.mxu0 0
        %1191 = vmatmul.mubr.bf16.gmra.mxu0 %v1037
        %v1192 = vpop.f32.mrf.mxu0
        %v1193 = vadd.f32 0.0, %v1192
        %v1194 = vpop.f32.mrf.mxu0
        %v1195 = vpop.f32.mrf.mxu0
        %v1196 = vadd.f32 0.0, %v1195
        %v1197 = vpop.f32.mrf.mxu0
        %1198 = vdwg.mxu0
        %v1199 = vmax.f32 %v1137, 0.0
        %v1200 = vmax.f32 %v1140, 0.0
        %v1201 = vmax.f32 %v1145, 0.0
        %v1202 = vmax.f32 %v1148, 0.0
        %v1203 = vmax.f32 %v1153, 0.0
        %v1204 = vmax.f32 %v1156, 0.0
        %v1205 = vmax.f32 %v1161, 0.0
        %v1206 = vmax.f32 %v1164, 0.0
        %v1207 = vmax.f32 %v1169, 0.0
        %v1208 = vmax.f32 %v1172, 0.0
        %v1209 = vmax.f32 %v1177, 0.0
        %v1210 = vmax.f32 %v1180, 0.0
        %v1211 = vmax.f32 %v1185, 0.0
        %v1212 = vmax.f32 %v1188, 0.0
        %v1213 = vmax.f32 %v1193, 0.0
        %v1214 = vmax.f32 %v1196, 0.0
        %v1215 = vpack.c.bf16 %v1200, %v1199
        %v1216 = vpack.c.bf16 %v1202, %v1201
        %v1217 = vpack.c.bf16 %v1204, %v1203
        %v1218 = vpack.c.bf16 %v1206, %v1205
        %v1219 = vpack.c.bf16 %v1208, %v1207
        %v1220 = vpack.c.bf16 %v1210, %v1209
        %v1221 = vpack.c.bf16 %v1212, %v1211
        %v1222 = vpack.c.bf16 %v1214, %v1213
        %v1223 = vld [vmem:[%s457] sm:$0xf]
        %v1224 = vld [vmem:[%s457 + $0x4] sm:$0xf]
        %v1225 = vld [vmem:[%s457 + $0x8] sm:$0xf]
        %v1226 = vld [vmem:[%s457 + $0xc] sm:$0xf]
        %v1227 = vld [vmem:[%s457 + $0x10] sm:$0xf]
        %v1228 = vld [vmem:[%s457 + $0x14] sm:$0xf]
        %v1229 = vld [vmem:[%s457 + $0x18] sm:$0xf]
        %v1230 = vld [vmem:[%s457 + $0x1c] sm:$0xf]
        %v1231 = vld [vmem:[%s457 + $0x20] sm:$0xf]
        %v1232 = vld [vmem:[%s457 + $0x24] sm:$0xf]
        %v1233 = vld [vmem:[%s457 + $0x28] sm:$0xf]
        %v1234 = vld [vmem:[%s457 + $0x2c] sm:$0xf]
        %v1235 = vld [vmem:[%s457 + $0x30] sm:$0xf]
        %v1236 = vld [vmem:[%s457 + $0x34] sm:$0xf]
        %v1237 = vld [vmem:[%s457 + $0x38] sm:$0xf]
        %v1238 = vld [vmem:[%s457 + $0x3c] sm:$0xf]
        %v1247 = vunpack.c.l.b16 %v1223
        %v1248 = vunpack.c.l.b16 %v1224
        %v1249 = vunpack.c.l.b16 %v1225
        %v1250 = vunpack.c.l.b16 %v1226
        %v1251 = vunpack.c.l.b16 %v1227
        %v1252 = vunpack.c.l.b16 %v1228
        %v1253 = vunpack.c.l.b16 %v1229
        %v1254 = vunpack.c.l.b16 %v1230
        %v1255 = vpack.c.b16 %v1248, %v1247
        %v1256 = vpack.c.b16 %v1250, %v1249
        %v1257 = vpack.c.b16 %v1252, %v1251
        %v1258 = vpack.c.b16 %v1254, %v1253
        %vm1259 = vcmask 523264
        %v1261 = vsel %vm1259, %v1255, 0
        %v1264 = vsel %vm1259, %v1256, 0
        %v1267 = vsel %vm1259, %v1257, 0
        %v1270 = vsel %vm1259, %v1258, 0
        %1272 = vmatprep.subr.bf16.mxu0 0
        %1273 = vmatpush1.bf16.msra.mxu0 0
        %1274 = vmatprep.subr.bf16.mxu0 0
        %1275 = vmatpush1.bf16.msra.mxu0 0
        %1276 = vmatprep.subr.bf16.mxu0 0
        %1277 = vmatpush1.bf16.msra.mxu0 0
        %1278 = vmatprep.subr.bf16.mxu0 0
        %1279 = vmatpush1.bf16.msra.mxu0 0
        %1280 = vmatprep.subr.bf16.mxu0 0
        %1281 = vmatpush1.bf16.msra.mxu0 %v1218
        %1282 = vmatprep.subr.bf16.mxu0 0
        %1283 = vmatpush1.bf16.msra.mxu0 %v1217
        %1284 = vmatprep.subr.bf16.mxu0 0
        %1285 = vmatpush1.bf16.msra.mxu0 %v1216
        %1286 = vmatprep.subr.bf16.mxu0 0
        %1287 = vmatpush1.bf16.msra.mxu0 %v1215
        %1288 = vmatprep.subr.bf16.mxu0 0
        %1289 = vmatpush2.bf16.msra.mxu0 0
        %1290 = vmatprep.subr.bf16.mxu0 0
        %1291 = vmatpush2.bf16.msra.mxu0 0
        %1292 = vmatprep.subr.bf16.mxu0 0
        %1293 = vmatpush2.bf16.msra.mxu0 0
        %1294 = vmatprep.subr.bf16.mxu0 0
        %1295 = vmatpush2.bf16.msra.mxu0 0
        %1296 = vmatprep.subr.bf16.mxu0 0
        %1297 = vmatpush2.bf16.msra.mxu0 0
        %1298 = vmatprep.subr.bf16.mxu0 0
        %1299 = vmatpush2.bf16.msra.mxu0 0
        %1300 = vmatprep.subr.bf16.mxu0 0
        %1301 = vmatpush2.bf16.msra.mxu0 0
        %1302 = vmatprep.subr.bf16.mxu0 0
        %1303 = vmatpush2.bf16.msra.mxu0 0
        %1304 = vmatprep.mubr.bf16.mxu0 0
        %1305 = vmatmul.mubr.bf16.gmra.mxu0 %v1261
        %v1306 = vpop.f32.mrf.mxu0
        %v1307 = vadd.f32 0.0, %v1306
        %v1308 = vpop.f32.mrf.mxu0
        %v1309 = vpop.f32.mrf.mxu0
        %v1310 = vadd.f32 0.0, %v1309
        %v1311 = vpop.f32.mrf.mxu0
        %1312 = vmatprep.mubr.bf16.mxu0 0
        %1313 = vmatmul.mubr.bf16.gmra.mxu0 %v1264
        %v1314 = vpop.f32.mrf.mxu0
        %v1315 = vadd.f32 0.0, %v1314
        %v1316 = vpop.f32.mrf.mxu0
        %v1317 = vpop.f32.mrf.mxu0
        %v1318 = vadd.f32 0.0, %v1317
        %v1319 = vpop.f32.mrf.mxu0
        %1320 = vmatprep.mubr.bf16.mxu0 0
        %1321 = vmatmul.mubr.bf16.gmra.mxu0 %v1267
        %v1322 = vpop.f32.mrf.mxu0
        %v1323 = vadd.f32 0.0, %v1322
        %v1324 = vpop.f32.mrf.mxu0
        %v1325 = vpop.f32.mrf.mxu0
        %v1326 = vadd.f32 0.0, %v1325
        %v1327 = vpop.f32.mrf.mxu0
        %1328 = vmatprep.mubr.bf16.mxu0 0
        %1329 = vmatmul.mubr.bf16.gmra.mxu0 %v1270
        %v1330 = vpop.f32.mrf.mxu0
        %v1331 = vadd.f32 0.0, %v1330
        %v1332 = vpop.f32.mrf.mxu0
        %v1333 = vpop.f32.mrf.mxu0
        %v1334 = vadd.f32 0.0, %v1333
        %v1335 = vpop.f32.mrf.mxu0
        %1336 = vdwg.mxu0
        %v1345 = vunpack.c.l.b16 %v1231
        %v1346 = vunpack.c.l.b16 %v1232
        %v1347 = vunpack.c.l.b16 %v1233
        %v1348 = vunpack.c.l.b16 %v1234
        %v1349 = vunpack.c.l.b16 %v1235
        %v1350 = vunpack.c.l.b16 %v1236
        %v1351 = vunpack.c.l.b16 %v1237
        %v1352 = vunpack.c.l.b16 %v1238
        %v1353 = vpack.c.b16 %v1346, %v1345
        %v1354 = vpack.c.b16 %v1348, %v1347
        %v1355 = vpack.c.b16 %v1350, %v1349
        %v1356 = vpack.c.b16 %v1352, %v1351
        %v1358 = vsel %vm1259, %v1353, 0
        %v1361 = vsel %vm1259, %v1354, 0
        %v1364 = vsel %vm1259, %v1355, 0
        %v1367 = vsel %vm1259, %v1356, 0
        %1369 = vmatprep.subr.bf16.mxu0 0
        %1370 = vmatpush1.bf16.msra.mxu0 0
        %1371 = vmatprep.subr.bf16.mxu0 0
        %1372 = vmatpush1.bf16.msra.mxu0 0
        %1373 = vmatprep.subr.bf16.mxu0 0
        %1374 = vmatpush1.bf16.msra.mxu0 0
        %1375 = vmatprep.subr.bf16.mxu0 0
        %1376 = vmatpush1.bf16.msra.mxu0 0
        %1377 = vmatprep.subr.bf16.mxu0 0
        %1378 = vmatpush1.bf16.msra.mxu0 %v1222
        %1379 = vmatprep.subr.bf16.mxu0 0
        %1380 = vmatpush1.bf16.msra.mxu0 %v1221
        %1381 = vmatprep.subr.bf16.mxu0 0
        %1382 = vmatpush1.bf16.msra.mxu0 %v1220
        %1383 = vmatprep.subr.bf16.mxu0 0
        %1384 = vmatpush1.bf16.msra.mxu0 %v1219
        %1385 = vmatprep.subr.bf16.mxu0 0
        %1386 = vmatpush2.bf16.msra.mxu0 0
        %1387 = vmatprep.subr.bf16.mxu0 0
        %1388 = vmatpush2.bf16.msra.mxu0 0
        %1389 = vmatprep.subr.bf16.mxu0 0
        %1390 = vmatpush2.bf16.msra.mxu0 0
        %1391 = vmatprep.subr.bf16.mxu0 0
        %1392 = vmatpush2.bf16.msra.mxu0 0
        %1393 = vmatprep.subr.bf16.mxu0 0
        %1394 = vmatpush2.bf16.msra.mxu0 0
        %1395 = vmatprep.subr.bf16.mxu0 0
        %1396 = vmatpush2.bf16.msra.mxu0 0
        %1397 = vmatprep.subr.bf16.mxu0 0
        %1398 = vmatpush2.bf16.msra.mxu0 0
        %1399 = vmatprep.subr.bf16.mxu0 0
        %1400 = vmatpush2.bf16.msra.mxu0 0
        %1401 = vmatprep.mubr.bf16.mxu0 0
        %1402 = vmatmul.mubr.bf16.gmra.mxu0 %v1358
        %v1403 = vpop.f32.mrf.mxu0
        %v1404 = vadd.f32 0.0, %v1403
        %v1405 = vpop.f32.mrf.mxu0
        %v1406 = vpop.f32.mrf.mxu0
        %v1407 = vadd.f32 0.0, %v1406
        %v1408 = vpop.f32.mrf.mxu0
        %1409 = vmatprep.mubr.bf16.mxu0 0
        %1410 = vmatmul.mubr.bf16.gmra.mxu0 %v1361
        %v1411 = vpop.f32.mrf.mxu0
        %v1412 = vadd.f32 0.0, %v1411
        %v1413 = vpop.f32.mrf.mxu0
        %v1414 = vpop.f32.mrf.mxu0
        %v1415 = vadd.f32 0.0, %v1414
        %v1416 = vpop.f32.mrf.mxu0
        %1417 = vmatprep.mubr.bf16.mxu0 0
        %1418 = vmatmul.mubr.bf16.gmra.mxu0 %v1364
        %v1419 = vpop.f32.mrf.mxu0
        %v1420 = vadd.f32 0.0, %v1419
        %v1421 = vpop.f32.mrf.mxu0
        %v1422 = vpop.f32.mrf.mxu0
        %v1423 = vadd.f32 0.0, %v1422
        %v1424 = vpop.f32.mrf.mxu0
        %1425 = vmatprep.mubr.bf16.mxu0 0
        %1426 = vmatmul.mubr.bf16.gmra.mxu0 %v1367
        %v1427 = vpop.f32.mrf.mxu0
        %v1428 = vadd.f32 0.0, %v1427
        %v1429 = vpop.f32.mrf.mxu0
        %v1430 = vpop.f32.mrf.mxu0
        %v1431 = vadd.f32 0.0, %v1430
        %v1432 = vpop.f32.mrf.mxu0
        %1433 = vdwg.mxu0
        %v1434 = vld [vmem:[#allocation5] sm:$0xf]
        %v1435 = vld [vmem:[#allocation5 + $0x4] sm:$0xf]
        %v1436 = vld [vmem:[#allocation5 + $0x8] sm:$0xf]
        %v1437 = vld [vmem:[#allocation5 + $0xc] sm:$0xf]
        %v1438 = vld [vmem:[#allocation5 + $0x10] sm:$0xf]
        %v1439 = vld [vmem:[#allocation5 + $0x14] sm:$0xf]
        %v1440 = vld [vmem:[#allocation5 + $0x18] sm:$0xf]
        %v1441 = vld [vmem:[#allocation5 + $0x1c] sm:$0xf]
        %v1442 = vld [vmem:[#allocation5 + $0x20] sm:$0xf]
        %v1443 = vld [vmem:[#allocation5 + $0x24] sm:$0xf]
        %v1444 = vld [vmem:[#allocation5 + $0x28] sm:$0xf]
        %v1445 = vld [vmem:[#allocation5 + $0x2c] sm:$0xf]
        %v1446 = vld [vmem:[#allocation5 + $0x30] sm:$0xf]
        %v1447 = vld [vmem:[#allocation5 + $0x34] sm:$0xf]
        %v1448 = vld [vmem:[#allocation5 + $0x38] sm:$0xf]
        %v1449 = vld [vmem:[#allocation5 + $0x3c] sm:$0xf]
        %v1466 = vunpack.c.l.b16 %v1434
        %v1467 = vunpack.c.l.b16 %v1435
        %v1468 = vunpack.c.l.b16 %v1436
        %v1469 = vunpack.c.l.b16 %v1437
        %v1470 = vunpack.c.l.b16 %v1438
        %v1471 = vunpack.c.l.b16 %v1439
        %v1472 = vunpack.c.l.b16 %v1440
        %v1473 = vunpack.c.l.b16 %v1441
        %v1474 = vunpack.c.l.b16 %v1442
        %v1475 = vunpack.c.l.b16 %v1443
        %v1476 = vunpack.c.l.b16 %v1444
        %v1477 = vunpack.c.l.b16 %v1445
        %v1478 = vunpack.c.l.b16 %v1446
        %v1479 = vunpack.c.l.b16 %v1447
        %v1480 = vunpack.c.l.b16 %v1448
        %v1481 = vunpack.c.l.b16 %v1449
        %v1482 = vpack.c.b16 %v1467, %v1466
        %v1483 = vpack.c.b16 %v1469, %v1468
        %v1484 = vpack.c.b16 %v1471, %v1470
        %v1485 = vpack.c.b16 %v1473, %v1472
        %v1486 = vpack.c.b16 %v1475, %v1474
        %v1487 = vpack.c.b16 %v1477, %v1476
        %v1488 = vpack.c.b16 %v1479, %v1478
        %v1489 = vpack.c.b16 %v1481, %v1480
        %1498 = vmatprep.subr.bf16.mxu0 0
        %1499 = vmatpush1.bf16.msra.mxu0 %v1489
        %1500 = vmatprep.subr.bf16.mxu0 0
        %1501 = vmatpush1.bf16.msra.mxu0 %v1488
        %1502 = vmatprep.subr.bf16.mxu0 0
        %1503 = vmatpush1.bf16.msra.mxu0 %v1487
        %1504 = vmatprep.subr.bf16.mxu0 0
        %1505 = vmatpush1.bf16.msra.mxu0 %v1486
        %1506 = vmatprep.subr.bf16.mxu0 0
        %1507 = vmatpush1.bf16.msra.mxu0 %v1485
        %1508 = vmatprep.subr.bf16.mxu0 0
        %1509 = vmatpush1.bf16.msra.mxu0 %v1484
        %1510 = vmatprep.subr.bf16.mxu0 0
        %1511 = vmatpush1.bf16.msra.mxu0 %v1483
        %1512 = vmatprep.subr.bf16.mxu0 0
        %1513 = vmatpush1.bf16.msra.mxu0 %v1482
        %1514 = vmatprep.subr.bf16.mxu0 0
        %1515 = vmatpush2.bf16.msra.mxu0 0
        %1516 = vmatprep.subr.bf16.mxu0 0
        %1517 = vmatpush2.bf16.msra.mxu0 0
        %1518 = vmatprep.subr.bf16.mxu0 0
        %1519 = vmatpush2.bf16.msra.mxu0 0
        %1520 = vmatprep.subr.bf16.mxu0 0
        %1521 = vmatpush2.bf16.msra.mxu0 0
        %1522 = vmatprep.subr.bf16.mxu0 0
        %1523 = vmatpush2.bf16.msra.mxu0 0
        %1524 = vmatprep.subr.bf16.mxu0 0
        %1525 = vmatpush2.bf16.msra.mxu0 0
        %1526 = vmatprep.subr.bf16.mxu0 0
        %1527 = vmatpush2.bf16.msra.mxu0 0
        %1528 = vmatprep.subr.bf16.mxu0 0
        %1529 = vmatpush2.bf16.msra.mxu0 0
        %1530 = vmatprep.mubr.bf16.mxu0 0
        %1531 = vmatmul.mubr.bf16.gmra.mxu0 %v1215
        %v1532 = vpop.f32.mrf.mxu0
        %v1533 = vadd.f32 0.0, %v1532
        %v1534 = vpop.f32.mrf.mxu0
        %v1535 = vpop.f32.mrf.mxu0
        %v1536 = vadd.f32 0.0, %v1535
        %v1537 = vpop.f32.mrf.mxu0
        %1538 = vmatprep.mubr.bf16.mxu0 0
        %1539 = vmatmul.mubr.bf16.gmra.mxu0 %v1216
        %v1540 = vpop.f32.mrf.mxu0
        %v1541 = vadd.f32 0.0, %v1540
        %v1542 = vpop.f32.mrf.mxu0
        %v1543 = vpop.f32.mrf.mxu0
        %v1544 = vadd.f32 0.0, %v1543
        %v1545 = vpop.f32.mrf.mxu0
        %1546 = vmatprep.mubr.bf16.mxu0 0
        %1547 = vmatmul.mubr.bf16.gmra.mxu0 %v1217
        %v1548 = vpop.f32.mrf.mxu0
        %v1549 = vadd.f32 0.0, %v1548
        %v1550 = vpop.f32.mrf.mxu0
        %v1551 = vpop.f32.mrf.mxu0
        %v1552 = vadd.f32 0.0, %v1551
        %v1553 = vpop.f32.mrf.mxu0
        %1554 = vmatprep.mubr.bf16.mxu0 0
        %1555 = vmatmul.mubr.bf16.gmra.mxu0 %v1218
        %v1556 = vpop.f32.mrf.mxu0
        %v1557 = vadd.f32 0.0, %v1556
        %v1558 = vpop.f32.mrf.mxu0
        %v1559 = vpop.f32.mrf.mxu0
        %v1560 = vadd.f32 0.0, %v1559
        %v1561 = vpop.f32.mrf.mxu0
        %1562 = vmatprep.mubr.bf16.mxu0 0
        %1563 = vmatmul.mubr.bf16.gmra.mxu0 %v1219
        %v1564 = vpop.f32.mrf.mxu0
        %v1565 = vadd.f32 0.0, %v1564
        %v1566 = vpop.f32.mrf.mxu0
        %v1567 = vpop.f32.mrf.mxu0
        %v1568 = vadd.f32 0.0, %v1567
        %v1569 = vpop.f32.mrf.mxu0
        %1570 = vmatprep.mubr.bf16.mxu0 0
        %1571 = vmatmul.mubr.bf16.gmra.mxu0 %v1220
        %v1572 = vpop.f32.mrf.mxu0
        %v1573 = vadd.f32 0.0, %v1572
        %v1574 = vpop.f32.mrf.mxu0
        %v1575 = vpop.f32.mrf.mxu0
        %v1576 = vadd.f32 0.0, %v1575
        %v1577 = vpop.f32.mrf.mxu0
        %1578 = vmatprep.mubr.bf16.mxu0 0
        %1579 = vmatmul.mubr.bf16.gmra.mxu0 %v1221
        %v1580 = vpop.f32.mrf.mxu0
        %v1581 = vadd.f32 0.0, %v1580
        %v1582 = vpop.f32.mrf.mxu0
        %v1583 = vpop.f32.mrf.mxu0
        %v1584 = vadd.f32 0.0, %v1583
        %v1585 = vpop.f32.mrf.mxu0
        %1586 = vmatprep.mubr.bf16.mxu0 0
        %1587 = vmatmul.mubr.bf16.gmra.mxu0 %v1222
        %v1588 = vpop.f32.mrf.mxu0
        %v1589 = vadd.f32 0.0, %v1588
        %v1590 = vpop.f32.mrf.mxu0
        %v1591 = vpop.f32.mrf.mxu0
        %v1592 = vadd.f32 0.0, %v1591
        %v1593 = vpop.f32.mrf.mxu0
        %1594 = vdwg.mxu0
        %v1595 = vadd.f32 %v1137, %v1533
        %v1596 = vadd.f32 %v1140, %v1536
        %v1597 = vadd.f32 %v1145, %v1541
        %v1598 = vadd.f32 %v1148, %v1544
        %v1599 = vadd.f32 %v1153, %v1549
        %v1600 = vadd.f32 %v1156, %v1552
        %v1601 = vadd.f32 %v1161, %v1557
        %v1602 = vadd.f32 %v1164, %v1560
        %v1603 = vadd.f32 %v1169, %v1565
        %v1604 = vadd.f32 %v1172, %v1568
        %v1605 = vadd.f32 %v1177, %v1573
        %v1606 = vadd.f32 %v1180, %v1576
        %v1607 = vadd.f32 %v1185, %v1581
        %v1608 = vadd.f32 %v1188, %v1584
        %v1609 = vadd.f32 %v1193, %v1589
        %v1610 = vadd.f32 %v1196, %v1592
        %v1611 = vpack.c.bf16 %v1310, %v1307
        %v1612 = vpack.c.bf16 %v1318, %v1315
        %v1613 = vpack.c.bf16 %v1326, %v1323
        %v1614 = vpack.c.bf16 %v1334, %v1331
        %v1615 = vpack.c.bf16 %v1407, %v1404
        %v1616 = vpack.c.bf16 %v1415, %v1412
        %v1617 = vpack.c.bf16 %v1423, %v1420
        %v1618 = vpack.c.bf16 %v1431, %v1428
        %v1619 = vld [vmem:[#allocation8] sm:$0xf]
        %v1620 = vld [vmem:[#allocation8 + $0x4] sm:$0xf]
        %v1621 = vld [vmem:[#allocation8 + $0x8] sm:$0xf]
        %v1622 = vld [vmem:[#allocation8 + $0xc] sm:$0xf]
        %v1623 = vld [vmem:[#allocation8 + $0x10] sm:$0xf]
        %v1624 = vld [vmem:[#allocation8 + $0x14] sm:$0xf]
        %v1625 = vld [vmem:[#allocation8 + $0x18] sm:$0xf]
        %v1626 = vld [vmem:[#allocation8 + $0x1c] sm:$0xf]
        %v1627 = vld [vmem:[#allocation8 + $0x20] sm:$0xf]
        %v1628 = vld [vmem:[#allocation8 + $0x24] sm:$0xf]
        %v1629 = vld [vmem:[#allocation8 + $0x28] sm:$0xf]
        %v1630 = vld [vmem:[#allocation8 + $0x2c] sm:$0xf]
        %v1631 = vld [vmem:[#allocation8 + $0x30] sm:$0xf]
        %v1632 = vld [vmem:[#allocation8 + $0x34] sm:$0xf]
        %v1633 = vld [vmem:[#allocation8 + $0x38] sm:$0xf]
        %v1634 = vld [vmem:[#allocation8 + $0x3c] sm:$0xf]
        %v1651 = vunpack.c.l.b16 %v1619
        %v1652 = vunpack.c.l.b16 %v1620
        %v1653 = vunpack.c.l.b16 %v1621
        %v1654 = vunpack.c.l.b16 %v1622
        %v1655 = vunpack.c.l.b16 %v1623
        %v1656 = vunpack.c.l.b16 %v1624
        %v1657 = vunpack.c.l.b16 %v1625
        %v1658 = vunpack.c.l.b16 %v1626
        %v1659 = vunpack.c.l.b16 %v1627
        %v1660 = vunpack.c.l.b16 %v1628
        %v1661 = vunpack.c.l.b16 %v1629
        %v1662 = vunpack.c.l.b16 %v1630
        %v1663 = vunpack.c.l.b16 %v1631
        %v1664 = vunpack.c.l.b16 %v1632
        %v1665 = vunpack.c.l.b16 %v1633
        %v1666 = vunpack.c.l.b16 %v1634
        %v1667 = vpack.c.b16 %v1652, %v1651
        %v1668 = vpack.c.b16 %v1654, %v1653
        %v1669 = vpack.c.b16 %v1656, %v1655
        %v1670 = vpack.c.b16 %v1658, %v1657
        %v1671 = vpack.c.b16 %v1660, %v1659
        %v1672 = vpack.c.b16 %v1662, %v1661
        %v1673 = vpack.c.b16 %v1664, %v1663
        %v1674 = vpack.c.b16 %v1666, %v1665
        %1683 = vmatprep.subr.bf16.mxu0 0
        %1684 = vmatpush1.bf16.msra.mxu0 %v1674
        %1685 = vmatprep.subr.bf16.mxu0 0
        %1686 = vmatpush1.bf16.msra.mxu0 %v1673
        %1687 = vmatprep.subr.bf16.mxu0 0
        %1688 = vmatpush1.bf16.msra.mxu0 %v1672
        %1689 = vmatprep.subr.bf16.mxu0 0
        %1690 = vmatpush1.bf16.msra.mxu0 %v1671
        %1691 = vmatprep.subr.bf16.mxu0 0
        %1692 = vmatpush1.bf16.msra.mxu0 %v1670
        %1693 = vmatprep.subr.bf16.mxu0 0
        %1694 = vmatpush1.bf16.msra.mxu0 %v1669
        %1695 = vmatprep.subr.bf16.mxu0 0
        %1696 = vmatpush1.bf16.msra.mxu0 %v1668
        %1697 = vmatprep.subr.bf16.mxu0 0
        %1698 = vmatpush1.bf16.msra.mxu0 %v1667
        %1699 = vmatprep.subr.bf16.mxu0 0
        %1700 = vmatpush2.bf16.msra.mxu0 0
        %1701 = vmatprep.subr.bf16.mxu0 0
        %1702 = vmatpush2.bf16.msra.mxu0 0
        %1703 = vmatprep.subr.bf16.mxu0 0
        %1704 = vmatpush2.bf16.msra.mxu0 0
        %1705 = vmatprep.subr.bf16.mxu0 0
        %1706 = vmatpush2.bf16.msra.mxu0 0
        %1707 = vmatprep.subr.bf16.mxu0 0
        %1708 = vmatpush2.bf16.msra.mxu0 0
        %1709 = vmatprep.subr.bf16.mxu0 0
        %1710 = vmatpush2.bf16.msra.mxu0 0
        %1711 = vmatprep.subr.bf16.mxu0 0
        %1712 = vmatpush2.bf16.msra.mxu0 0
        %1713 = vmatprep.subr.bf16.mxu0 0
        %1714 = vmatpush2.bf16.msra.mxu0 0
        %1715 = vmatprep.mubr.bf16.mxu0 0
        %1716 = vmatmul.mubr.bf16.gmra.mxu0 %v1611
        %v1717 = vpop.f32.mrf.mxu0
        %v1718 = vadd.f32 0.0, %v1717
        %v1719 = vpop.f32.mrf.mxu0
        %v1720 = vpop.f32.mrf.mxu0
        %v1721 = vadd.f32 0.0, %v1720
        %v1722 = vpop.f32.mrf.mxu0
        %1723 = vmatprep.mubr.bf16.mxu0 0
        %1724 = vmatmul.mubr.bf16.gmra.mxu0 %v1612
        %v1725 = vpop.f32.mrf.mxu0
        %v1726 = vadd.f32 0.0, %v1725
        %v1727 = vpop.f32.mrf.mxu0
        %v1728 = vpop.f32.mrf.mxu0
        %v1729 = vadd.f32 0.0, %v1728
        %v1730 = vpop.f32.mrf.mxu0
        %1731 = vmatprep.mubr.bf16.mxu0 0
        %1732 = vmatmul.mubr.bf16.gmra.mxu0 %v1613
        %v1733 = vpop.f32.mrf.mxu0
        %v1734 = vadd.f32 0.0, %v1733
        %v1735 = vpop.f32.mrf.mxu0
        %v1736 = vpop.f32.mrf.mxu0
        %v1737 = vadd.f32 0.0, %v1736
        %v1738 = vpop.f32.mrf.mxu0
        %1739 = vmatprep.mubr.bf16.mxu0 0
        %1740 = vmatmul.mubr.bf16.gmra.mxu0 %v1614
        %v1741 = vpop.f32.mrf.mxu0
        %v1742 = vadd.f32 0.0, %v1741
        %v1743 = vpop.f32.mrf.mxu0
        %v1744 = vpop.f32.mrf.mxu0
        %v1745 = vadd.f32 0.0, %v1744
        %v1746 = vpop.f32.mrf.mxu0
        %1747 = vmatprep.mubr.bf16.mxu0 0
        %1748 = vmatmul.mubr.bf16.gmra.mxu0 %v1615
        %v1749 = vpop.f32.mrf.mxu0
        %v1750 = vadd.f32 0.0, %v1749
        %v1751 = vpop.f32.mrf.mxu0
        %v1752 = vpop.f32.mrf.mxu0
        %v1753 = vadd.f32 0.0, %v1752
        %v1754 = vpop.f32.mrf.mxu0
        %1755 = vmatprep.mubr.bf16.mxu0 0
        %1756 = vmatmul.mubr.bf16.gmra.mxu0 %v1616
        %v1757 = vpop.f32.mrf.mxu0
        %v1758 = vadd.f32 0.0, %v1757
        %v1759 = vpop.f32.mrf.mxu0
        %v1760 = vpop.f32.mrf.mxu0
        %v1761 = vadd.f32 0.0, %v1760
        %v1762 = vpop.f32.mrf.mxu0
        %1763 = vmatprep.mubr.bf16.mxu0 0
        %1764 = vmatmul.mubr.bf16.gmra.mxu0 %v1617
        %v1765 = vpop.f32.mrf.mxu0
        %v1766 = vadd.f32 0.0, %v1765
        %v1767 = vpop.f32.mrf.mxu0
        %v1768 = vpop.f32.mrf.mxu0
        %v1769 = vadd.f32 0.0, %v1768
        %v1770 = vpop.f32.mrf.mxu0
        %1771 = vmatprep.mubr.bf16.mxu0 0
        %1772 = vmatmul.mubr.bf16.gmra.mxu0 %v1618
        %v1773 = vpop.f32.mrf.mxu0
        %v1774 = vadd.f32 0.0, %v1773
        %v1775 = vpop.f32.mrf.mxu0
        %v1776 = vpop.f32.mrf.mxu0
        %v1777 = vadd.f32 0.0, %v1776
        %v1778 = vpop.f32.mrf.mxu0
        %1779 = vdwg.mxu0
        %v1780 = vadd.f32 %v1595, %v1718
        %v1781 = vadd.f32 %v1596, %v1721
        %v1782 = vadd.f32 %v1597, %v1726
        %v1783 = vadd.f32 %v1598, %v1729
        %v1784 = vadd.f32 %v1599, %v1734
        %v1785 = vadd.f32 %v1600, %v1737
        %v1786 = vadd.f32 %v1601, %v1742
        %v1787 = vadd.f32 %v1602, %v1745
        %v1788 = vadd.f32 %v1603, %v1750
        %v1789 = vadd.f32 %v1604, %v1753
        %v1790 = vadd.f32 %v1605, %v1758
        %v1791 = vadd.f32 %v1606, %v1761
        %v1792 = vadd.f32 %v1607, %v1766
        %v1793 = vadd.f32 %v1608, %v1769
        %v1794 = vadd.f32 %v1609, %v1774
        %v1795 = vadd.f32 %v1610, %v1777
        %v1796 = vmax.f32 %v1780, 0.0
        %v1797 = vmax.f32 %v1781, 0.0
        %v1798 = vmax.f32 %v1782, 0.0
        %v1799 = vmax.f32 %v1783, 0.0
        %v1800 = vmax.f32 %v1784, 0.0
        %v1801 = vmax.f32 %v1785, 0.0
        %v1802 = vmax.f32 %v1786, 0.0
        %v1803 = vmax.f32 %v1787, 0.0
        %v1804 = vmax.f32 %v1788, 0.0
        %v1805 = vmax.f32 %v1789, 0.0
        %v1806 = vmax.f32 %v1790, 0.0
        %v1807 = vmax.f32 %v1791, 0.0
        %v1808 = vmax.f32 %v1792, 0.0
        %v1809 = vmax.f32 %v1793, 0.0
        %v1810 = vmax.f32 %v1794, 0.0
        %v1811 = vmax.f32 %v1795, 0.0
        %v1812 = vpack.c.bf16 %v1797, %v1796
        %v1813 = vpack.c.bf16 %v1799, %v1798
        %v1814 = vpack.c.bf16 %v1801, %v1800
        %v1815 = vpack.c.bf16 %v1803, %v1802
        %v1816 = vpack.c.bf16 %v1805, %v1804
        %v1817 = vpack.c.bf16 %v1807, %v1806
        %v1818 = vpack.c.bf16 %v1809, %v1808
        %v1819 = vpack.c.bf16 %v1811, %v1810
        %v1820 = vld [vmem:[%s457] sm:$0xf]
        %v1821 = vld [vmem:[%s457 + $0x4] sm:$0xf]
        %v1822 = vld [vmem:[%s457 + $0x8] sm:$0xf]
        %v1823 = vld [vmem:[%s457 + $0xc] sm:$0xf]
        %v1824 = vld [vmem:[%s457 + $0x10] sm:$0xf]
        %v1825 = vld [vmem:[%s457 + $0x14] sm:$0xf]
        %v1826 = vld [vmem:[%s457 + $0x18] sm:$0xf]
        %v1827 = vld [vmem:[%s457 + $0x1c] sm:$0xf]
        %v1828 = vld [vmem:[%s457 + $0x20] sm:$0xf]
        %v1829 = vld [vmem:[%s457 + $0x24] sm:$0xf]
        %v1830 = vld [vmem:[%s457 + $0x28] sm:$0xf]
        %v1831 = vld [vmem:[%s457 + $0x2c] sm:$0xf]
        %v1832 = vld [vmem:[%s457 + $0x30] sm:$0xf]
        %v1833 = vld [vmem:[%s457 + $0x34] sm:$0xf]
        %v1834 = vld [vmem:[%s457 + $0x38] sm:$0xf]
        %v1835 = vld [vmem:[%s457 + $0x3c] sm:$0xf]
        %v1844 = vunpack.c.l.b16 %v1820
        %v1845 = vunpack.c.l.b16 %v1821
        %v1846 = vunpack.c.l.b16 %v1822
        %v1847 = vunpack.c.l.b16 %v1823
        %v1848 = vunpack.c.l.b16 %v1824
        %v1849 = vunpack.c.l.b16 %v1825
        %v1850 = vunpack.c.l.b16 %v1826
        %v1851 = vunpack.c.l.b16 %v1827
        %v1852 = vpack.c.b16 %v1845, %v1844
        %v1853 = vpack.c.b16 %v1847, %v1846
        %v1854 = vpack.c.b16 %v1849, %v1848
        %v1855 = vpack.c.b16 %v1851, %v1850
        %v1857 = vsel %vm1259, %v1852, 0
        %v1860 = vsel %vm1259, %v1853, 0
        %v1863 = vsel %vm1259, %v1854, 0
        %v1866 = vsel %vm1259, %v1855, 0
        %1868 = vmatprep.subr.bf16.mxu0 0
        %1869 = vmatpush1.bf16.msra.mxu0 0
        %1870 = vmatprep.subr.bf16.mxu0 0
        %1871 = vmatpush1.bf16.msra.mxu0 0
        %1872 = vmatprep.subr.bf16.mxu0 0
        %1873 = vmatpush1.bf16.msra.mxu0 0
        %1874 = vmatprep.subr.bf16.mxu0 0
        %1875 = vmatpush1.bf16.msra.mxu0 0
        %1876 = vmatprep.subr.bf16.mxu0 0
        %1877 = vmatpush1.bf16.msra.mxu0 %v1815
        %1878 = vmatprep.subr.bf16.mxu0 0
        %1879 = vmatpush1.bf16.msra.mxu0 %v1814
        %1880 = vmatprep.subr.bf16.mxu0 0
        %1881 = vmatpush1.bf16.msra.mxu0 %v1813
        %1882 = vmatprep.subr.bf16.mxu0 0
        %1883 = vmatpush1.bf16.msra.mxu0 %v1812
        %1884 = vmatprep.subr.bf16.mxu0 0
        %1885 = vmatpush2.bf16.msra.mxu0 0
        %1886 = vmatprep.subr.bf16.mxu0 0
        %1887 = vmatpush2.bf16.msra.mxu0 0
        %1888 = vmatprep.subr.bf16.mxu0 0
        %1889 = vmatpush2.bf16.msra.mxu0 0
        %1890 = vmatprep.subr.bf16.mxu0 0
        %1891 = vmatpush2.bf16.msra.mxu0 0
        %1892 = vmatprep.subr.bf16.mxu0 0
        %1893 = vmatpush2.bf16.msra.mxu0 0
        %1894 = vmatprep.subr.bf16.mxu0 0
        %1895 = vmatpush2.bf16.msra.mxu0 0
        %1896 = vmatprep.subr.bf16.mxu0 0
        %1897 = vmatpush2.bf16.msra.mxu0 0
        %1898 = vmatprep.subr.bf16.mxu0 0
        %1899 = vmatpush2.bf16.msra.mxu0 0
        %1900 = vmatprep.mubr.bf16.mxu0 0
        %1901 = vmatmul.mubr.bf16.gmra.mxu0 %v1857
        %v1902 = vpop.f32.mrf.mxu0
        %v1903 = vadd.f32 0.0, %v1902
        %v1904 = vpop.f32.mrf.mxu0
        %v1905 = vpop.f32.mrf.mxu0
        %v1906 = vadd.f32 0.0, %v1905
        %v1907 = vpop.f32.mrf.mxu0
        %1908 = vmatprep.mubr.bf16.mxu0 0
        %1909 = vmatmul.mubr.bf16.gmra.mxu0 %v1860
        %v1910 = vpop.f32.mrf.mxu0
        %v1911 = vadd.f32 0.0, %v1910
        %v1912 = vpop.f32.mrf.mxu0
        %v1913 = vpop.f32.mrf.mxu0
        %v1914 = vadd.f32 0.0, %v1913
        %v1915 = vpop.f32.mrf.mxu0
        %1916 = vmatprep.mubr.bf16.mxu0 0
        %1917 = vmatmul.mubr.bf16.gmra.mxu0 %v1863
        %v1918 = vpop.f32.mrf.mxu0
        %v1919 = vadd.f32 0.0, %v1918
        %v1920 = vpop.f32.mrf.mxu0
        %v1921 = vpop.f32.mrf.mxu0
        %v1922 = vadd.f32 0.0, %v1921
        %v1923 = vpop.f32.mrf.mxu0
        %1924 = vmatprep.mubr.bf16.mxu0 0
        %1925 = vmatmul.mubr.bf16.gmra.mxu0 %v1866
        %v1926 = vpop.f32.mrf.mxu0
        %v1927 = vadd.f32 0.0, %v1926
        %v1928 = vpop.f32.mrf.mxu0
        %v1929 = vpop.f32.mrf.mxu0
        %v1930 = vadd.f32 0.0, %v1929
        %v1931 = vpop.f32.mrf.mxu0
        %1932 = vdwg.mxu0
        %v1941 = vunpack.c.l.b16 %v1828
        %v1942 = vunpack.c.l.b16 %v1829
        %v1943 = vunpack.c.l.b16 %v1830
        %v1944 = vunpack.c.l.b16 %v1831
        %v1945 = vunpack.c.l.b16 %v1832
        %v1946 = vunpack.c.l.b16 %v1833
        %v1947 = vunpack.c.l.b16 %v1834
        %v1948 = vunpack.c.l.b16 %v1835
        %v1949 = vpack.c.b16 %v1942, %v1941
        %v1950 = vpack.c.b16 %v1944, %v1943
        %v1951 = vpack.c.b16 %v1946, %v1945
        %v1952 = vpack.c.b16 %v1948, %v1947
        %v1954 = vsel %vm1259, %v1949, 0
        %v1957 = vsel %vm1259, %v1950, 0
        %v1960 = vsel %vm1259, %v1951, 0
        %v1963 = vsel %vm1259, %v1952, 0
        %1965 = vmatprep.subr.bf16.mxu0 0
        %1966 = vmatpush1.bf16.msra.mxu0 0
        %1967 = vmatprep.subr.bf16.mxu0 0
        %1968 = vmatpush1.bf16.msra.mxu0 0
        %1969 = vmatprep.subr.bf16.mxu0 0
        %1970 = vmatpush1.bf16.msra.mxu0 0
        %1971 = vmatprep.subr.bf16.mxu0 0
        %1972 = vmatpush1.bf16.msra.mxu0 0
        %1973 = vmatprep.subr.bf16.mxu0 0
        %1974 = vmatpush1.bf16.msra.mxu0 %v1819
        %1975 = vmatprep.subr.bf16.mxu0 0
        %1976 = vmatpush1.bf16.msra.mxu0 %v1818
        %1977 = vmatprep.subr.bf16.mxu0 0
        %1978 = vmatpush1.bf16.msra.mxu0 %v1817
        %1979 = vmatprep.subr.bf16.mxu0 0
        %1980 = vmatpush1.bf16.msra.mxu0 %v1816
        %1981 = vmatprep.subr.bf16.mxu0 0
        %1982 = vmatpush2.bf16.msra.mxu0 0
        %1983 = vmatprep.subr.bf16.mxu0 0
        %1984 = vmatpush2.bf16.msra.mxu0 0
        %1985 = vmatprep.subr.bf16.mxu0 0
        %1986 = vmatpush2.bf16.msra.mxu0 0
        %1987 = vmatprep.subr.bf16.mxu0 0
        %1988 = vmatpush2.bf16.msra.mxu0 0
        %1989 = vmatprep.subr.bf16.mxu0 0
        %1990 = vmatpush2.bf16.msra.mxu0 0
        %1991 = vmatprep.subr.bf16.mxu0 0
        %1992 = vmatpush2.bf16.msra.mxu0 0
        %1993 = vmatprep.subr.bf16.mxu0 0
        %1994 = vmatpush2.bf16.msra.mxu0 0
        %1995 = vmatprep.subr.bf16.mxu0 0
        %1996 = vmatpush2.bf16.msra.mxu0 0
        %1997 = vmatprep.mubr.bf16.mxu0 0
        %1998 = vmatmul.mubr.bf16.gmra.mxu0 %v1954
        %v1999 = vpop.f32.mrf.mxu0
        %v2000 = vadd.f32 0.0, %v1999
        %v2001 = vpop.f32.mrf.mxu0
        %v2002 = vpop.f32.mrf.mxu0
        %v2003 = vadd.f32 0.0, %v2002
        %v2004 = vpop.f32.mrf.mxu0
        %2005 = vmatprep.mubr.bf16.mxu0 0
        %2006 = vmatmul.mubr.bf16.gmra.mxu0 %v1957
        %v2007 = vpop.f32.mrf.mxu0
        %v2008 = vadd.f32 0.0, %v2007
        %v2009 = vpop.f32.mrf.mxu0
        %v2010 = vpop.f32.mrf.mxu0
        %v2011 = vadd.f32 0.0, %v2010
        %v2012 = vpop.f32.mrf.mxu0
        %2013 = vmatprep.mubr.bf16.mxu0 0
        %2014 = vmatmul.mubr.bf16.gmra.mxu0 %v1960
        %v2015 = vpop.f32.mrf.mxu0
        %v2016 = vadd.f32 0.0, %v2015
        %v2017 = vpop.f32.mrf.mxu0
        %v2018 = vpop.f32.mrf.mxu0
        %v2019 = vadd.f32 0.0, %v2018
        %v2020 = vpop.f32.mrf.mxu0
        %2021 = vmatprep.mubr.bf16.mxu0 0
        %2022 = vmatmul.mubr.bf16.gmra.mxu0 %v1963
        %v2023 = vpop.f32.mrf.mxu0
        %v2024 = vadd.f32 0.0, %v2023
        %v2025 = vpop.f32.mrf.mxu0
        %v2026 = vpop.f32.mrf.mxu0
        %v2027 = vadd.f32 0.0, %v2026
        %v2028 = vpop.f32.mrf.mxu0
        %2029 = vdwg.mxu0
        %v2030 = vld [vmem:[#allocation7] sm:$0xf]
        %v2031 = vld [vmem:[#allocation7 + $0x4] sm:$0xf]
        %v2032 = vld [vmem:[#allocation7 + $0x8] sm:$0xf]
        %v2033 = vld [vmem:[#allocation7 + $0xc] sm:$0xf]
        %v2034 = vld [vmem:[#allocation7 + $0x10] sm:$0xf]
        %v2035 = vld [vmem:[#allocation7 + $0x14] sm:$0xf]
        %v2036 = vld [vmem:[#allocation7 + $0x18] sm:$0xf]
        %v2037 = vld [vmem:[#allocation7 + $0x1c] sm:$0xf]
        %v2038 = vld [vmem:[#allocation7 + $0x20] sm:$0xf]
        %v2039 = vld [vmem:[#allocation7 + $0x24] sm:$0xf]
        %v2040 = vld [vmem:[#allocation7 + $0x28] sm:$0xf]
        %v2041 = vld [vmem:[#allocation7 + $0x2c] sm:$0xf]
        %v2042 = vld [vmem:[#allocation7 + $0x30] sm:$0xf]
        %v2043 = vld [vmem:[#allocation7 + $0x34] sm:$0xf]
        %v2044 = vld [vmem:[#allocation7 + $0x38] sm:$0xf]
        %v2045 = vld [vmem:[#allocation7 + $0x3c] sm:$0xf]
        %v2062 = vunpack.c.l.b16 %v2030
        %v2063 = vunpack.c.l.b16 %v2031
        %v2064 = vunpack.c.l.b16 %v2032
        %v2065 = vunpack.c.l.b16 %v2033
        %v2066 = vunpack.c.l.b16 %v2034
        %v2067 = vunpack.c.l.b16 %v2035
        %v2068 = vunpack.c.l.b16 %v2036
        %v2069 = vunpack.c.l.b16 %v2037
        %v2070 = vunpack.c.l.b16 %v2038
        %v2071 = vunpack.c.l.b16 %v2039
        %v2072 = vunpack.c.l.b16 %v2040
        %v2073 = vunpack.c.l.b16 %v2041
        %v2074 = vunpack.c.l.b16 %v2042
        %v2075 = vunpack.c.l.b16 %v2043
        %v2076 = vunpack.c.l.b16 %v2044
        %v2077 = vunpack.c.l.b16 %v2045
        %v2078 = vpack.c.b16 %v2063, %v2062
        %v2079 = vpack.c.b16 %v2065, %v2064
        %v2080 = vpack.c.b16 %v2067, %v2066
        %v2081 = vpack.c.b16 %v2069, %v2068
        %v2082 = vpack.c.b16 %v2071, %v2070
        %v2083 = vpack.c.b16 %v2073, %v2072
        %v2084 = vpack.c.b16 %v2075, %v2074
        %v2085 = vpack.c.b16 %v2077, %v2076
        %2094 = vmatprep.subr.bf16.mxu0 0
        %2095 = vmatpush1.bf16.msra.mxu0 %v2085
        %2096 = vmatprep.subr.bf16.mxu0 0
        %2097 = vmatpush1.bf16.msra.mxu0 %v2084
        %2098 = vmatprep.subr.bf16.mxu0 0
        %2099 = vmatpush1.bf16.msra.mxu0 %v2083
        %2100 = vmatprep.subr.bf16.mxu0 0
        %2101 = vmatpush1.bf16.msra.mxu0 %v2082
        %2102 = vmatprep.subr.bf16.mxu0 0
        %2103 = vmatpush1.bf16.msra.mxu0 %v2081
        %2104 = vmatprep.subr.bf16.mxu0 0
        %2105 = vmatpush1.bf16.msra.mxu0 %v2080
        %2106 = vmatprep.subr.bf16.mxu0 0
        %2107 = vmatpush1.bf16.msra.mxu0 %v2079
        %2108 = vmatprep.subr.bf16.mxu0 0
        %2109 = vmatpush1.bf16.msra.mxu0 %v2078
        %2110 = vmatprep.subr.bf16.mxu0 0
        %2111 = vmatpush2.bf16.msra.mxu0 0
        %2112 = vmatprep.subr.bf16.mxu0 0
        %2113 = vmatpush2.bf16.msra.mxu0 0
        %2114 = vmatprep.subr.bf16.mxu0 0
        %2115 = vmatpush2.bf16.msra.mxu0 0
        %2116 = vmatprep.subr.bf16.mxu0 0
        %2117 = vmatpush2.bf16.msra.mxu0 0
        %2118 = vmatprep.subr.bf16.mxu0 0
        %2119 = vmatpush2.bf16.msra.mxu0 0
        %2120 = vmatprep.subr.bf16.mxu0 0
        %2121 = vmatpush2.bf16.msra.mxu0 0
        %2122 = vmatprep.subr.bf16.mxu0 0
        %2123 = vmatpush2.bf16.msra.mxu0 0
        %2124 = vmatprep.subr.bf16.mxu0 0
        %2125 = vmatpush2.bf16.msra.mxu0 0
        %2126 = vmatprep.mubr.bf16.mxu0 0
        %2127 = vmatmul.mubr.bf16.gmra.mxu0 %v1812
        %v2128 = vpop.f32.mrf.mxu0
        %v2129 = vadd.f32 0.0, %v2128
        %v2130 = vpop.f32.mrf.mxu0
        %v2131 = vpop.f32.mrf.mxu0
        %v2132 = vadd.f32 0.0, %v2131
        %v2133 = vpop.f32.mrf.mxu0
        %2134 = vmatprep.mubr.bf16.mxu0 0
        %2135 = vmatmul.mubr.bf16.gmra.mxu0 %v1813
        %v2136 = vpop.f32.mrf.mxu0
        %v2137 = vadd.f32 0.0, %v2136
        %v2138 = vpop.f32.mrf.mxu0
        %v2139 = vpop.f32.mrf.mxu0
        %v2140 = vadd.f32 0.0, %v2139
        %v2141 = vpop.f32.mrf.mxu0
        %2142 = vmatprep.mubr.bf16.mxu0 0
        %2143 = vmatmul.mubr.bf16.gmra.mxu0 %v1814
        %v2144 = vpop.f32.mrf.mxu0
        %v2145 = vadd.f32 0.0, %v2144
        %v2146 = vpop.f32.mrf.mxu0
        %v2147 = vpop.f32.mrf.mxu0
        %v2148 = vadd.f32 0.0, %v2147
        %v2149 = vpop.f32.mrf.mxu0
        %2150 = vmatprep.mubr.bf16.mxu0 0
        %2151 = vmatmul.mubr.bf16.gmra.mxu0 %v1815
        %v2152 = vpop.f32.mrf.mxu0
        %v2153 = vadd.f32 0.0, %v2152
        %v2154 = vpop.f32.mrf.mxu0
        %v2155 = vpop.f32.mrf.mxu0
        %v2156 = vadd.f32 0.0, %v2155
        %v2157 = vpop.f32.mrf.mxu0
        %2158 = vmatprep.mubr.bf16.mxu0 0
        %2159 = vmatmul.mubr.bf16.gmra.mxu0 %v1816
        %v2160 = vpop.f32.mrf.mxu0
        %v2161 = vadd.f32 0.0, %v2160
        %v2162 = vpop.f32.mrf.mxu0
        %v2163 = vpop.f32.mrf.mxu0
        %v2164 = vadd.f32 0.0, %v2163
        %v2165 = vpop.f32.mrf.mxu0
        %2166 = vmatprep.mubr.bf16.mxu0 0
        %2167 = vmatmul.mubr.bf16.gmra.mxu0 %v1817
        %v2168 = vpop.f32.mrf.mxu0
        %v2169 = vadd.f32 0.0, %v2168
        %v2170 = vpop.f32.mrf.mxu0
        %v2171 = vpop.f32.mrf.mxu0
        %v2172 = vadd.f32 0.0, %v2171
        %v2173 = vpop.f32.mrf.mxu0
        %2174 = vmatprep.mubr.bf16.mxu0 0
        %2175 = vmatmul.mubr.bf16.gmra.mxu0 %v1818
        %v2176 = vpop.f32.mrf.mxu0
        %v2177 = vadd.f32 0.0, %v2176
        %v2178 = vpop.f32.mrf.mxu0
        %v2179 = vpop.f32.mrf.mxu0
        %v2180 = vadd.f32 0.0, %v2179
        %v2181 = vpop.f32.mrf.mxu0
        %2182 = vmatprep.mubr.bf16.mxu0 0
        %2183 = vmatmul.mubr.bf16.gmra.mxu0 %v1819
        %v2184 = vpop.f32.mrf.mxu0
        %v2185 = vadd.f32 0.0, %v2184
        %v2186 = vpop.f32.mrf.mxu0
        %v2187 = vpop.f32.mrf.mxu0
        %v2188 = vadd.f32 0.0, %v2187
        %v2189 = vpop.f32.mrf.mxu0
        %2190 = vdwg.mxu0
        %v2191 = vadd.f32 %v1137, %v2129
        %v2192 = vadd.f32 %v1140, %v2132
        %v2193 = vadd.f32 %v1145, %v2137
        %v2194 = vadd.f32 %v1148, %v2140
        %v2195 = vadd.f32 %v1153, %v2145
        %v2196 = vadd.f32 %v1156, %v2148
        %v2197 = vadd.f32 %v1161, %v2153
        %v2198 = vadd.f32 %v1164, %v2156
        %v2199 = vadd.f32 %v1169, %v2161
        %v2200 = vadd.f32 %v1172, %v2164
        %v2201 = vadd.f32 %v1177, %v2169
        %v2202 = vadd.f32 %v1180, %v2172
        %v2203 = vadd.f32 %v1185, %v2177
        %v2204 = vadd.f32 %v1188, %v2180
        %v2205 = vadd.f32 %v1193, %v2185
        %v2206 = vadd.f32 %v1196, %v2188
        %v2207 = vpack.c.bf16 %v1906, %v1903
        %v2208 = vpack.c.bf16 %v1914, %v1911
        %v2209 = vpack.c.bf16 %v1922, %v1919
        %v2210 = vpack.c.bf16 %v1930, %v1927
        %v2211 = vpack.c.bf16 %v2003, %v2000
        %v2212 = vpack.c.bf16 %v2011, %v2008
        %v2213 = vpack.c.bf16 %v2019, %v2016
        %v2214 = vpack.c.bf16 %v2027, %v2024
        %v2215 = vld [vmem:[#allocation10] sm:$0xf]
        %v2216 = vld [vmem:[#allocation10 + $0x4] sm:$0xf]
        %v2217 = vld [vmem:[#allocation10 + $0x8] sm:$0xf]
        %v2218 = vld [vmem:[#allocation10 + $0xc] sm:$0xf]
        %v2219 = vld [vmem:[#allocation10 + $0x10] sm:$0xf]
        %v2220 = vld [vmem:[#allocation10 + $0x14] sm:$0xf]
        %v2221 = vld [vmem:[#allocation10 + $0x18] sm:$0xf]
        %v2222 = vld [vmem:[#allocation10 + $0x1c] sm:$0xf]
        %v2223 = vld [vmem:[#allocation10 + $0x20] sm:$0xf]
        %v2224 = vld [vmem:[#allocation10 + $0x24] sm:$0xf]
        %v2225 = vld [vmem:[#allocation10 + $0x28] sm:$0xf]
        %v2226 = vld [vmem:[#allocation10 + $0x2c] sm:$0xf]
        %v2227 = vld [vmem:[#allocation10 + $0x30] sm:$0xf]
        %v2228 = vld [vmem:[#allocation10 + $0x34] sm:$0xf]
        %v2229 = vld [vmem:[#allocation10 + $0x38] sm:$0xf]
        %v2230 = vld [vmem:[#allocation10 + $0x3c] sm:$0xf]
        %v2247 = vunpack.c.l.b16 %v2215
        %v2248 = vunpack.c.l.b16 %v2216
        %v2249 = vunpack.c.l.b16 %v2217
        %v2250 = vunpack.c.l.b16 %v2218
        %v2251 = vunpack.c.l.b16 %v2219
        %v2252 = vunpack.c.l.b16 %v2220
        %v2253 = vunpack.c.l.b16 %v2221
        %v2254 = vunpack.c.l.b16 %v2222
        %v2255 = vunpack.c.l.b16 %v2223
        %v2256 = vunpack.c.l.b16 %v2224
        %v2257 = vunpack.c.l.b16 %v2225
        %v2258 = vunpack.c.l.b16 %v2226
        %v2259 = vunpack.c.l.b16 %v2227
        %v2260 = vunpack.c.l.b16 %v2228
        %v2261 = vunpack.c.l.b16 %v2229
        %v2262 = vunpack.c.l.b16 %v2230
        %v2263 = vpack.c.b16 %v2248, %v2247
        %v2264 = vpack.c.b16 %v2250, %v2249
        %v2265 = vpack.c.b16 %v2252, %v2251
        %v2266 = vpack.c.b16 %v2254, %v2253
        %v2267 = vpack.c.b16 %v2256, %v2255
        %v2268 = vpack.c.b16 %v2258, %v2257
        %v2269 = vpack.c.b16 %v2260, %v2259
        %v2270 = vpack.c.b16 %v2262, %v2261
        %2279 = vmatprep.subr.bf16.mxu0 0
        %2280 = vmatpush1.bf16.msra.mxu0 %v2270
        %2281 = vmatprep.subr.bf16.mxu0 0
        %2282 = vmatpush1.bf16.msra.mxu0 %v2269
        %2283 = vmatprep.subr.bf16.mxu0 0
        %2284 = vmatpush1.bf16.msra.mxu0 %v2268
        %2285 = vmatprep.subr.bf16.mxu0 0
        %2286 = vmatpush1.bf16.msra.mxu0 %v2267
        %2287 = vmatprep.subr.bf16.mxu0 0
        %2288 = vmatpush1.bf16.msra.mxu0 %v2266
        %2289 = vmatprep.subr.bf16.mxu0 0
        %2290 = vmatpush1.bf16.msra.mxu0 %v2265
        %2291 = vmatprep.subr.bf16.mxu0 0
        %2292 = vmatpush1.bf16.msra.mxu0 %v2264
        %2293 = vmatprep.subr.bf16.mxu0 0
        %2294 = vmatpush1.bf16.msra.mxu0 %v2263
        %2295 = vmatprep.subr.bf16.mxu0 0
        %2296 = vmatpush2.bf16.msra.mxu0 0
        %2297 = vmatprep.subr.bf16.mxu0 0
        %2298 = vmatpush2.bf16.msra.mxu0 0
        %2299 = vmatprep.subr.bf16.mxu0 0
        %2300 = vmatpush2.bf16.msra.mxu0 0
        %2301 = vmatprep.subr.bf16.mxu0 0
        %2302 = vmatpush2.bf16.msra.mxu0 0
        %2303 = vmatprep.subr.bf16.mxu0 0
        %2304 = vmatpush2.bf16.msra.mxu0 0
        %2305 = vmatprep.subr.bf16.mxu0 0
        %2306 = vmatpush2.bf16.msra.mxu0 0
        %2307 = vmatprep.subr.bf16.mxu0 0
        %2308 = vmatpush2.bf16.msra.mxu0 0
        %2309 = vmatprep.subr.bf16.mxu0 0
        %2310 = vmatpush2.bf16.msra.mxu0 0
        %2311 = vmatprep.mubr.bf16.mxu0 0
        %2312 = vmatmul.mubr.bf16.gmra.mxu0 %v2207
        %v2313 = vpop.f32.mrf.mxu0
        %v2314 = vadd.f32 0.0, %v2313
        %v2315 = vpop.f32.mrf.mxu0
        %v2316 = vpop.f32.mrf.mxu0
        %v2317 = vadd.f32 0.0, %v2316
        %v2318 = vpop.f32.mrf.mxu0
        %2319 = vmatprep.mubr.bf16.mxu0 0
        %2320 = vmatmul.mubr.bf16.gmra.mxu0 %v2208
        %v2321 = vpop.f32.mrf.mxu0
        %v2322 = vadd.f32 0.0, %v2321
        %v2323 = vpop.f32.mrf.mxu0
        %v2324 = vpop.f32.mrf.mxu0
        %v2325 = vadd.f32 0.0, %v2324
        %v2326 = vpop.f32.mrf.mxu0
        %2327 = vmatprep.mubr.bf16.mxu0 0
        %2328 = vmatmul.mubr.bf16.gmra.mxu0 %v2209
        %v2329 = vpop.f32.mrf.mxu0
        %v2330 = vadd.f32 0.0, %v2329
        %v2331 = vpop.f32.mrf.mxu0
        %v2332 = vpop.f32.mrf.mxu0
        %v2333 = vadd.f32 0.0, %v2332
        %v2334 = vpop.f32.mrf.mxu0
        %2335 = vmatprep.mubr.bf16.mxu0 0
        %2336 = vmatmul.mubr.bf16.gmra.mxu0 %v2210
        %v2337 = vpop.f32.mrf.mxu0
        %v2338 = vadd.f32 0.0, %v2337
        %v2339 = vpop.f32.mrf.mxu0
        %v2340 = vpop.f32.mrf.mxu0
        %v2341 = vadd.f32 0.0, %v2340
        %v2342 = vpop.f32.mrf.mxu0
        %2343 = vmatprep.mubr.bf16.mxu0 0
        %2344 = vmatmul.mubr.bf16.gmra.mxu0 %v2211
        %v2345 = vpop.f32.mrf.mxu0
        %v2346 = vadd.f32 0.0, %v2345
        %v2347 = vpop.f32.mrf.mxu0
        %v2348 = vpop.f32.mrf.mxu0
        %v2349 = vadd.f32 0.0, %v2348
        %v2350 = vpop.f32.mrf.mxu0
        %2351 = vmatprep.mubr.bf16.mxu0 0
        %2352 = vmatmul.mubr.bf16.gmra.mxu0 %v2212
        %v2353 = vpop.f32.mrf.mxu0
        %v2354 = vadd.f32 0.0, %v2353
        %v2355 = vpop.f32.mrf.mxu0
        %v2356 = vpop.f32.mrf.mxu0
        %v2357 = vadd.f32 0.0, %v2356
        %v2358 = vpop.f32.mrf.mxu0
        %2359 = vmatprep.mubr.bf16.mxu0 0
        %2360 = vmatmul.mubr.bf16.gmra.mxu0 %v2213
        %v2361 = vpop.f32.mrf.mxu0
        %v2362 = vadd.f32 0.0, %v2361
        %v2363 = vpop.f32.mrf.mxu0
        %v2364 = vpop.f32.mrf.mxu0
        %v2365 = vadd.f32 0.0, %v2364
        %v2366 = vpop.f32.mrf.mxu0
        %2367 = vmatprep.mubr.bf16.mxu0 0
        %2368 = vmatmul.mubr.bf16.gmra.mxu0 %v2214
        %v2369 = vpop.f32.mrf.mxu0
        %v2370 = vadd.f32 0.0, %v2369
        %v2371 = vpop.f32.mrf.mxu0
        %v2372 = vpop.f32.mrf.mxu0
        %v2373 = vadd.f32 0.0, %v2372
        %v2374 = vpop.f32.mrf.mxu0
        %2375 = vdwg.mxu0
        %v2376 = vadd.f32 %v2191, %v2314
        %v2377 = vadd.f32 %v2192, %v2317
        %v2378 = vadd.f32 %v2193, %v2322
        %v2379 = vadd.f32 %v2194, %v2325
        %v2380 = vadd.f32 %v2195, %v2330
        %v2381 = vadd.f32 %v2196, %v2333
        %v2382 = vadd.f32 %v2197, %v2338
        %v2383 = vadd.f32 %v2198, %v2341
        %v2384 = vadd.f32 %v2199, %v2346
        %v2385 = vadd.f32 %v2200, %v2349
        %v2386 = vadd.f32 %v2201, %v2354
        %v2387 = vadd.f32 %v2202, %v2357
        %v2388 = vadd.f32 %v2203, %v2362
        %v2389 = vadd.f32 %v2204, %v2365
        %v2390 = vadd.f32 %v2205, %v2370
        %v2391 = vadd.f32 %v2206, %v2373
        %v2392 = vmax.f32 %v2376, 0.0
        %v2393 = vmax.f32 %v2377, 0.0
        %v2394 = vmax.f32 %v2378, 0.0
        %v2395 = vmax.f32 %v2379, 0.0
        %v2396 = vmax.f32 %v2380, 0.0
        %v2397 = vmax.f32 %v2381, 0.0
        %v2398 = vmax.f32 %v2382, 0.0
        %v2399 = vmax.f32 %v2383, 0.0
        %v2400 = vmax.f32 %v2384, 0.0
        %v2401 = vmax.f32 %v2385, 0.0
        %v2402 = vmax.f32 %v2386, 0.0
        %v2403 = vmax.f32 %v2387, 0.0
        %v2404 = vmax.f32 %v2388, 0.0
        %v2405 = vmax.f32 %v2389, 0.0
        %v2406 = vmax.f32 %v2390, 0.0
        %v2407 = vmax.f32 %v2391, 0.0
        %v2408 = vpack.c.bf16 %v2393, %v2392
        %v2409 = vpack.c.bf16 %v2395, %v2394
        %v2410 = vpack.c.bf16 %v2397, %v2396
        %v2411 = vpack.c.bf16 %v2399, %v2398
        %v2412 = vpack.c.bf16 %v2401, %v2400
        %v2413 = vpack.c.bf16 %v2403, %v2402
        %v2414 = vpack.c.bf16 %v2405, %v2404
        %v2415 = vpack.c.bf16 %v2407, %v2406
        %v2424 = vunpack.c.l.b16 %v2408
        %v2425 = vunpack.c.h.b16 %v2408
        %v2426 = vunpack.c.l.b16 %v2409
        %v2427 = vunpack.c.h.b16 %v2409
        %v2428 = vunpack.c.l.b16 %v2410
        %v2429 = vunpack.c.h.b16 %v2410
        %v2430 = vunpack.c.l.b16 %v2411
        %v2431 = vunpack.c.h.b16 %v2411
        %v2432 = vunpack.c.l.b16 %v2412
        %v2433 = vunpack.c.h.b16 %v2412
        %v2434 = vunpack.c.l.b16 %v2413
        %v2435 = vunpack.c.h.b16 %v2413
        %v2436 = vunpack.c.l.b16 %v2414
        %v2437 = vunpack.c.h.b16 %v2414
        %v2438 = vunpack.c.l.b16 %v2415
        %v2439 = vunpack.c.h.b16 %v2415
        %v2440 = vpack.c.b16 %v2424, %v2424
        %v2441 = vpack.c.b16 %v2425, %v2425
        %v2442 = vpack.c.b16 %v2426, %v2426
        %v2443 = vpack.c.b16 %v2427, %v2427
        %v2444 = vpack.c.b16 %v2428, %v2428
        %v2445 = vpack.c.b16 %v2429, %v2429
        %v2446 = vpack.c.b16 %v2430, %v2430
        %v2447 = vpack.c.b16 %v2431, %v2431
        %v2448 = vpack.c.b16 %v2432, %v2432
        %v2449 = vpack.c.b16 %v2433, %v2433
        %v2450 = vpack.c.b16 %v2434, %v2434
        %v2451 = vpack.c.b16 %v2435, %v2435
        %v2452 = vpack.c.b16 %v2436, %v2436
        %v2453 = vpack.c.b16 %v2437, %v2437
        %v2454 = vpack.c.b16 %v2438, %v2438
        %v2455 = vpack.c.b16 %v2439, %v2439
        %2472 = vst [vmem:[%s437] sm:$0xf] %v2440
        %2473 = vst [vmem:[%s437 + $0x4] sm:$0xf] %v2441
        %2474 = vst [vmem:[%s437 + $0x8] sm:$0xf] %v2442
        %2475 = vst [vmem:[%s437 + $0xc] sm:$0xf] %v2443
        %2476 = vst [vmem:[%s437 + $0x10] sm:$0xf] %v2444
        %2477 = vst [vmem:[%s437 + $0x14] sm:$0xf] %v2445
        %2478 = vst [vmem:[%s437 + $0x18] sm:$0xf] %v2446
        %2479 = vst [vmem:[%s437 + $0x1c] sm:$0xf] %v2447
        %2480 = vst [vmem:[%s437 + $0x20] sm:$0xf] %v2448
        %2481 = vst [vmem:[%s437 + $0x24] sm:$0xf] %v2449
        %2482 = vst [vmem:[%s437 + $0x28] sm:$0xf] %v2450
        %2483 = vst [vmem:[%s437 + $0x2c] sm:$0xf] %v2451
        %2484 = vst [vmem:[%s437 + $0x30] sm:$0xf] %v2452
        %2485 = vst [vmem:[%s437 + $0x34] sm:$0xf] %v2453
        %2486 = vst [vmem:[%s437 + $0x38] sm:$0xf] %v2454
        %2487 = vst [vmem:[%s437 + $0x3c] sm:$0xf] %v2455
        %s2488 = sand.u32 %s238, 1
        %s2489 = scalar_lea.sflag [#allocation4], %s2488
        %s2490 = sand.u32 %s238, 1
        %s2491 = smul.addr %s2490, 64
        %s2492 = scalar_lea.vmem [#allocation11], %s2491
        // Predicated region
        $region77: #{tpu_custom_call.1} parent=55 // pred_check
          %p2493 = pneg %p248
        $region78: #{tpu_custom_call.1} parent=55 // pred_check_branch
          %2495 = sbr.rel (%p2493) target = $region80
        $region79: #{tpu_custom_call.1} parent=55 // pred_region
          %s2496 = smul.u32 2, %s26
          %s2498 = ssub.s32 1024, 1024
          %2499 = vsyncadd %s2489, %s2498
          %s2500 = smul.addr %s2496, 8
          %s2501 = smul.addr %s2500, 64
          %s2502 = scalar_lea.hbm %s9, %s2501
          %s2503 = sshll.u32 %s2492, 4
          %s2504 = int_to_ptr.vmem [resolvable:$true] %s2503
          %2509 = dma.vmem_to_hbm [thread:$0]  %s2504, 1024, %s2502, %s2489, 64, 64, 4
        $region80: #{tpu_custom_call.1} parent=55 // pred_fallthru
          _
      $region56: #{tpu_custom_call.1} parent=5 // pred_fallthru
        _
      %p2510 = scmp.le.s32.totalorder 2, %s21
      // Predicated region
      $region81: #{tpu_custom_call.1} parent=5 // pred_check
        %p2511 = pneg %p2510
      $region82: #{tpu_custom_call.1} parent=5 // pred_check_branch
        %2513 = sbr.rel (%p2511) target = $region84
      $region83: #{tpu_custom_call.1} parent=5 // pred_region
        %s2514 = ssub.s32 %s21, 2
        // Predicated region
        $region85: #{tpu_custom_call.1} parent=83 // pred_check
          %p2515 = pneg %p254
        $region86: #{tpu_custom_call.1} parent=83 // pred_check_branch
          %2517 = sbr.rel (%p2515) target = $region88
        $region87: #{tpu_custom_call.1} parent=83 // pred_region
          %s2518 = sand.u32 %s239, 1
          %s2519 = scalar_lea.sflag [#allocation4], %s2518
          %s2520 = sand.u32 %s239, 1
          %s2521 = smul.addr %s2520, 64
          %s2522 = scalar_lea.vmem [#allocation11], %s2521
          %2523 = dma.done %s2519, 1024
        $region88: #{tpu_custom_call.1} parent=83 // pred_fallthru
          _
      $region84: #{tpu_custom_call.1} parent=5 // pred_fallthru
        _
    $region6: #{tpu_custom_call.1} parent=1 // loop_footer
      %s25 = sadd.s32 1, %s21
    $region7: #{tpu_custom_call.1} parent=1 // loop_footer_branch
      %20 = sbr.rel target = $region3
    $region8: #{tpu_custom_call.1} parent=1 // loop_exit
      _
    %2524 = vsyncpa [#allocation3], 1
    %s2525 = scalar_lea.sflag [#allocation3], 1
    %2526 = vsyncpa %s2525, 1
    %2527 = vsyncpa [#allocation6], 1
    %2528 = vsyncpa [#allocation9], 1
    %2529 = vsyncpa [#allocation4], 1
    %s2530 = scalar_lea.sflag [#allocation4], 1
    %2531 = vsyncpa %s2530, 1

</llo_original>
